<compile_context>
chip_gen: v7x
topology: tpu7x:2x2x1
jax: 0.10.0
libtpu: 0.0.40
codegen_flags: <defaults>
</compile_context>

<pallas_src>
import functools

import jax
import jax.numpy as jnp
import numpy as np
from jax import lax
from jax.experimental import pallas as pl
from jax.experimental.pallas import tpu as pltpu


def _round_up(x, m):
    return (x + m - 1) // m * m


# ----------------------------------------------------------------------------
# Fused conv + bias + 2x2 max-pool + ReLU (single phase-fused dot per tile)
# ----------------------------------------------------------------------------
def _conv_pool_relu_kernel(p_ref, w_ref, b_ref, o_ref, *, tm):
    # p_ref: (Kd_pad, 4*tm) f32 -- 4 pooling phases as adjacent tm-wide lane blocks
    # w_ref: (Cout, Kd_pad) f32; b_ref: (Cout, 1) f32; o_ref: (Cout, tm) f32
    y = jnp.dot(w_ref[...], p_ref[...], preferred_element_type=jnp.float32)
    m = jnp.maximum(jnp.maximum(y[:, 0 * tm:1 * tm], y[:, 1 * tm:2 * tm]),
                    jnp.maximum(y[:, 2 * tm:3 * tm], y[:, 3 * tm:4 * tm]))
    # NOTE: padded M columns evaluate relu(bias); they are cropped in the wrapper.
    o_ref[...] = jnp.maximum(m + b_ref[...], 0.0)


def _im2col_nhwc(x, kh, kw):
    """(N,H,W,C) -> (N,OH,OW,kh*kw*C); feature index = (dy*kw + dx)*C + c."""
    N, H, W, C = x.shape
    OH, OW = H - kh + 1, W - kw + 1
    cols = []
    for dy in range(kh):
        for dx in range(kw):
            cols.append(x[:, dy:dy + OH, dx:dx + OW, :])
    return jnp.concatenate(cols, axis=-1)


def pallas_conv_pool_relu(x_nhwc, w_mat, b, k):
    """Conv2d(k x k, valid, stride 1) + MaxPool2d(2,2) + ReLU, fused.

    x_nhwc: (N,H,W,Cin) f32; w_mat: (k*k*Cin, Cout) with rows (dy*k+dx)*Cin+cin.
    Returns (N, HOp, WOp, Cout) f32 (NHWC)."""
    N, H, W, Cin = x_nhwc.shape
    Kd, Cout = w_mat.shape
    OH, OW = H - k + 1, W - k + 1
    HOp, WOp = OH // 2, OW // 2
    Mp = N * HOp * WOp

    tile_m = min(512, _round_up(Mp, 128))        # large static M tile per stage
    m_pad = _round_up(Mp, tile_m)
    n_tiles = m_pad // tile_m
    kd_pad = _round_up(Kd, 8)                    # unmasked f32 sublane tiles on K

    patches = _im2col_nhwc(x_nhwc, k, k)                     # (N, OH, OW, Kd)
    patches = patches[:, :2 * HOp, :2 * WOp, :]              # floor pooling crop
    patches = patches.reshape(N, HOp, 2, WOp, 2, Kd)
    patches = patches.transpose(5, 2, 4, 0, 1, 3)            # (Kd, pi, pj, N, HOp, WOp)
    patches = patches.reshape(Kd, 4, Mp)
    patches = jnp.pad(patches, ((0, kd_pad - Kd), (0, 0), (0, m_pad - Mp)))
    # -> (Kd_pad, n_tiles, 4, tile_m): phases of one m-tile are adjacent lane blocks
    patches = patches.reshape(kd_pad, 4, n_tiles, tile_m).transpose(0, 2, 1, 3)
    patches = patches.reshape(kd_pad, n_tiles * 4 * tile_m)

    wt = jnp.pad(jnp.transpose(w_mat), ((0, 0), (0, kd_pad - Kd)))   # (Cout, Kd_pad)
    bcol = b.reshape(Cout, 1).astype(jnp.float32)

    out = pl.pallas_call(
        functools.partial(_conv_pool_relu_kernel, tm=tile_m),
        out_shape=jax.ShapeDtypeStruct((Cout, m_pad), jnp.float32),
        grid=(n_tiles,),
        in_specs=[
            pl.BlockSpec((kd_pad, 4 * tile_m), lambda t: (0, t)),
            pl.BlockSpec((Cout, kd_pad), lambda t: (0, 0)),
            pl.BlockSpec((Cout, 1), lambda t: (0, 0)),
        ],
        out_specs=pl.BlockSpec((Cout, tile_m), lambda t: (0, t)),
        compiler_params=pltpu.CompilerParams(
            dimension_semantics=("parallel",)),
    )(patches, wt, bcol)

    out = out[:, :Mp]                                        # (Cout, N*HOp*WOp)
    out = out.reshape(Cout, N, HOp, WOp).transpose(1, 2, 3, 0)   # -> NHWC
    return out


# ----------------------------------------------------------------------------
# Fused fc_loc + affine_grid + grid_sample
# (bilinear, zeros padding, align_corners=False -- PyTorch defaults)
# ----------------------------------------------------------------------------
def _stn_sample_kernel(x_ref, xs_ref, wf1_ref, bf1_ref, wf2_ref, bf2_ref,
                       xb_ref, yb_ref, yq_ref, sel_ref, o_ref, th_s, *, H, W):
    # x_ref: (C*H, W) f32 slab for batch element n; xs_ref: (1, 90) f32
    # xb/yb_ref: (1, T) base grid for this HW tile; yq_ref: (C*H, 1) int32 (r mod H)
    # sel_ref: (C, C*H) channel selector; o_ref: (C, T); th_s: (1, 6) VMEM scratch.

    # fc_loc fused: theta = relu(xs @ wf1 + bf1) @ wf2 + bf2, once per batch elem.
    @pl.when(pl.program_id(1) == 0)
    def _():
        h = jnp.dot(xs_ref[...], wf1_ref[...], preferred_element_type=jnp.float32)
        h = jnp.maximum(h + bf1_ref[...], 0.0)
        th_s[...] = (jnp.dot(h, wf2_ref[...], preferred_element_type=jnp.float32)
                     + bf2_ref[...])

    th = th_s[...]                                           # (1, 6)
    Wf, Hf = float(W), float(H)
    xb = xb_ref[...]                                         # (1, T)
    yb = yb_ref[...]

    # affine_grid (align_corners=False); theta rows [t00 t01 t02; t10 t11 t12].
    gx = th[:, 0:1] * xb + th[:, 1:2] * yb + th[:, 2:3]
    gy = th[:, 3:4] * xb + th[:, 4:5] * yb + th[:, 5:6]

    # grid_sample un-normalization (align_corners=False) + bilinear corners.
    ix = ((gx + 1.0) * Wf - 1.0) * 0.5
    iy = ((gy + 1.0) * Hf - 1.0) * 0.5
    x0f = jnp.floor(ix)
    y0f = jnp.floor(iy)
    wx1 = ix - x0f
    wx0 = 1.0 - wx1
    wy1 = iy - y0f
    wy0 = 1.0 - wy1
    x0 = x0f.astype(jnp.int32)
    x1 = x0 + 1
    y0 = y0f.astype(jnp.int32)
    y1 = y0 + 1
    vx0 = (x0 >= 0) & (x0 <= W - 1)
    vx1 = (x1 >= 0) & (x1 <= W - 1)
    vy0 = (y0 >= 0) & (y0 <= H - 1)
    vy1 = (y1 >= 0) & (y1 <= H - 1)

    T = xb.shape[1]
    # x-direction one-hot corner matrix Mx: (W, T) (zeros padding via masks).
    xq = lax.broadcasted_iota(jnp.int32, (W, T), 0)
    mx = (jnp.where((xq == x0) & vx0, wx0, 0.0) +
          jnp.where((xq == x1) & vx1, wx1, 0.0))

    # y-direction corner weights over the C*H row axis via the hoisted row-index
    # plane (no in-kernel divide / mod): (C*H, T).
    yq = yq_ref[...]
    my = (jnp.where((yq == y0) & vy0, wy0, 0.0) +
          jnp.where((yq == y1) & vy1, wy1, 0.0))

    a = jnp.dot(x_ref[...], mx, preferred_element_type=jnp.float32)   # (C*H, T)
    o_ref[...] = jnp.dot(sel_ref[...], a * my,
                         preferred_element_type=jnp.float32)          # (C, T)


def pallas_stn_sample(x_flat, xs, wf1, bf1, wf2, bf2, C, H, W, tile_hw=128):
    """out = F.grid_sample(x, F.affine_grid(fc_loc(xs), x.size())), fused.

    x_flat: (N, C*H, W) f32; xs: (N, 90) f32.  Returns (N, C, H*W) f32."""
    N = x_flat.shape[0]
    K = xs.shape[1]
    H1 = wf1.shape[1]
    O = wf2.shape[1]
    HW = H * W
    HWp = _round_up(HW, tile_hw)                 # lane-dense padded output width
    n_hw = HWp // tile_hw

    # Batch-invariant planes, hoisted out of the kernel (constant-folded by XLA).
    p = jnp.arange(HWp, dtype=jnp.int32)
    valid = (p < HW).astype(jnp.float32)
    jj = (p % W).astype(jnp.float32)
    ii = (p // W).astype(jnp.float32)
    xb = (valid * ((2.0 * jj + 1.0) / W - 1.0)).reshape(1, HWp).astype(jnp.float32)
    yb = (valid * ((2.0 * ii + 1.0) / H - 1.0)).reshape(1, HWp).astype(jnp.float32)
    yq = (jnp.arange(C * H, dtype=jnp.int32) % H).reshape(C * H, 1)
    sel = (jnp.arange(C * H) // H ==
           jnp.arange(C)[:, None]).astype(jnp.float32)        # (C, C*H)

    xs3 = xs.reshape(N, 1, K)

    out = pl.pallas_call(
        functools.partial(_stn_sample_kernel, H=H, W=W),
        out_shape=jax.ShapeDtypeStruct((N, C, HWp), jnp.float32),
        grid=(N, n_hw),
        in_specs=[
            pl.BlockSpec((None, C * H, W), lambda n, t: (n, 0, 0)),   # x slab
            pl.BlockSpec((None, 1, K), lambda n, t: (n, 0, 0)),       # xs row
            pl.BlockSpec((K, H1), lambda n, t: (0, 0)),               # wf1
            pl.BlockSpec((1, H1), lambda n, t: (0, 0)),               # bf1
            pl.BlockSpec((H1, O), lambda n, t: (0, 0)),               # wf2
            pl.BlockSpec((1, O), lambda n, t: (0, 0)),                # bf2
            pl.BlockSpec((1, tile_hw), lambda n, t: (0, t)),          # xb tile
            pl.BlockSpec((1, tile_hw), lambda n, t: (0, t)),          # yb tile
            pl.BlockSpec((C * H, 1), lambda n, t: (0, 0)),            # r mod H
            pl.BlockSpec((C, C * H), lambda n, t: (0, 0)),            # selector
        ],
        out_specs=pl.BlockSpec((None, C, tile_hw), lambda n, t: (n, 0, t)),
        scratch_shapes=[pltpu.VMEM((1, O), jnp.float32)],             # theta
        compiler_params=pltpu.CompilerParams(
            dimension_semantics=("parallel", "arbitrary")),
    )(x_flat, xs3, wf1, bf1.reshape(1, H1), wf2, bf2.reshape(1, O),
      xb, yb, yq, sel)
    return out[:, :, :HW]


# ----------------------------------------------------------------------------
# Parameters & forward pass
# ----------------------------------------------------------------------------
def init_params(key):
    k1, k2, k3, k4, k5, k6 = jax.random.split(key, 6)
    # PyTorch layouts: conv (Cout, Cin, KH, KW); linear stored here as (in, out).
    w1 = 0.1 * jax.random.normal(k1, (8, 3, 7, 7), jnp.float32)
    b1 = 0.1 * jax.random.normal(k2, (8,), jnp.float32)
    w2 = 0.1 * jax.random.normal(k3, (10, 8, 5, 5), jnp.float32)
    b2 = 0.1 * jax.random.normal(k4, (10,), jnp.float32)
    wf1 = 0.1 * jax.random.normal(k5, (90, 32), jnp.float32)
    bf1 = 0.1 * jax.random.normal(k6, (32,), jnp.float32)
    wf2 = jnp.zeros((32, 6), jnp.float32)                         # fc_loc[2].weight.zero_()
    bf2 = jnp.array([1.0, 0.0, 0.0, 0.0, 1.0, 0.0], jnp.float32)  # identity bias
    return {
        "w1m": jnp.transpose(w1, (2, 3, 1, 0)).reshape(7 * 7 * 3, 8),
        "b1": b1,
        "w2m": jnp.transpose(w2, (2, 3, 1, 0)).reshape(5 * 5 * 8, 10),
        "b2": b2,
        "wf1": wf1, "bf1": bf1,
        "wf2": wf2, "bf2": bf2,
    }


def stn_forward(x, params):
    conv3d = (x.ndim == 5)
    if conv3d:
        b5, n5, d5, _, c5 = x.shape
        x = x.reshape(-1, d5, d5, c5).transpose(0, 3, 1, 2)       # -> NCHW
    N, C, H, W = x.shape
    x = x.astype(jnp.float32)

    # ---- localization network (fused conv+bias+pool+relu per stage) ----
    x_nhwc = jnp.transpose(x, (0, 2, 3, 1))
    y1 = pallas_conv_pool_relu(x_nhwc, params["w1m"], params["b1"], 7)   # (N,11,11,8)
    y2 = pallas_conv_pool_relu(y1, params["w2m"], params["b2"], 5)       # (N,3,3,10)

    # ---- flatten in PyTorch NCHW order; fc_loc is fused into the sampler ----
    xs = jnp.transpose(y2, (0, 3, 1, 2)).reshape(N, 10 * 3 * 3)          # (N, 90)

    # ---- fc_loc + affine_grid + grid_sample ----
    x_flat = x.reshape(N, C * H, W)
    out = pallas_stn_sample(x_flat, xs, params["wf1"], params["bf1"],
                            params["wf2"], params["bf2"], C, H, W)
    out = out.reshape(N, C, H, W)

    if conv3d:
        out = out.transpose(0, 2, 3, 1).reshape(b5, n5, d5, d5, c5)
    return out


# ----------------------------------------------------------------------------
if __name__ == "__main__":
    key = jax.random.PRNGKey(0)
    pkey, xkey = jax.random.split(key)
    params = init_params(pkey)

    # Spatial size must be 28x28 for the localization net's 10*3*3 flatten.
    x = jax.random.normal(xkey, (2, 3, 28, 28), jnp.float32)

    fwd = jax.jit(stn_forward)
    out = fwd(x, params)
    out = jax.block_until_ready(out)

    assert out.shape == x.shape and out.dtype == jnp.float32
    # fc_loc[2] has zero weight and identity bias, so theta is the identity
    # transform and (align_corners=False semantics) the STN reproduces x.
    np.testing.assert_allclose(np.asarray(out), np.asarray(x), rtol=1e-2, atol=1e-2)

    print("KERNEL_OK")
</pallas_src>

<mosaic_0001>
module attributes {stable_mosaic.version = 11 : i64} {
  func.func @_conv_pool_relu_kernel(%arg0: i32, %arg1: memref<152x1024xf32, #tpu.memory_space<vmem>>, %arg2: memref<8x152xf32, #tpu.memory_space<vmem>>, %arg3: memref<8x1xf32, #tpu.memory_space<vmem>>, %arg4: memref<8x256xf32, #tpu.memory_space<vmem>>) attributes {dimension_semantics = [#tpu.dimension_semantics<parallel>], iteration_bounds = array<i64: 1>, scalar_prefetch = 0 : i64, scratch_operands = 0 : i64, tpu.core_type = #tpu.core_type<tc>, window_params = [{transform_indices = @transform_0, window_bounds = array<i64: 152, 1024>}, {pipeline_mode = #tpu.pipeline_mode<synchronous>, transform_indices = @transform_1, window_bounds = array<i64: 8, 152>}, {pipeline_mode = #tpu.pipeline_mode<synchronous>, transform_indices = @transform_2, window_bounds = array<i64: 8, 1>}, {transform_indices = @transform_3, window_bounds = array<i64: 8, 256>}]} {
    %c0 = arith.constant 0 : index
    %c0_0 = arith.constant 0 : index
    %0 = vector.load %arg2[%c0, %c0_0] : memref<8x152xf32, #tpu.memory_space<vmem>>, vector<8x152xf32>
    %c0_1 = arith.constant 0 : index
    %c0_2 = arith.constant 0 : index
    %1 = vector.load %arg1[%c0_1, %c0_2] : memref<152x1024xf32, #tpu.memory_space<vmem>>, vector<152x1024xf32>
    %cst = arith.constant dense<0.000000e+00> : vector<8x1024xf32>
    %2 = tpu.matmul %0, %1, %cst {dimension_numbers = #tpu.dot_dimension_numbers<[1], [0], [0], [1], [0, 0, 1, 1], [], []>} : vector<8x152xf32>, vector<152x1024xf32>, vector<8x1024xf32> -> vector<8x1024xf32>
    %3 = vector.extract_strided_slice %2 {offsets = [0, 0], sizes = [8, 256], strides = [1, 1]} : vector<8x1024xf32> to vector<8x256xf32>
    %4 = vector.extract_strided_slice %2 {offsets = [0, 256], sizes = [8, 256], strides = [1, 1]} : vector<8x1024xf32> to vector<8x256xf32>
    %5 = arith.maximumf %3, %4 : vector<8x256xf32>
    %6 = vector.extract_strided_slice %2 {offsets = [0, 512], sizes = [8, 256], strides = [1, 1]} : vector<8x1024xf32> to vector<8x256xf32>
    %7 = vector.extract_strided_slice %2 {offsets = [0, 768], sizes = [8, 256], strides = [1, 1]} : vector<8x1024xf32> to vector<8x256xf32>
    %8 = arith.maximumf %6, %7 : vector<8x256xf32>
    %9 = arith.maximumf %5, %8 : vector<8x256xf32>
    %c0_3 = arith.constant 0 : index
    %c0_4 = arith.constant 0 : index
    %10 = vector.load %arg3[%c0_3, %c0_4] : memref<8x1xf32, #tpu.memory_space<vmem>>, vector<8x1xf32>
    %11 = vector.broadcast %10 : vector<8x1xf32> to vector<8x256xf32>
    %12 = arith.addf %9, %11 : vector<8x256xf32>
    %cst_5 = arith.constant 0.000000e+00 : f32
    %13 = vector.broadcast %cst_5 : f32 to vector<8x256xf32>
    %14 = arith.maximumf %12, %13 : vector<8x256xf32>
    %c0_6 = arith.constant 0 : index
    %c0_7 = arith.constant 0 : index
    %15 = vector.load %arg4[%c0_6, %c0_7] : memref<8x256xf32, #tpu.memory_space<vmem>>, vector<8x256xf32>
    tpu.vector_store %arg4[%c0_6, %c0_7], %14 {strides = array<i32>} : memref<8x256xf32, #tpu.memory_space<vmem>>, vector<8x256xf32>,
    return
  }
  func.func @transform_0(%arg0: i32) -> (i32, i32) {
    %c0_i32 = arith.constant 0 : i32
    %c0_i32_0 = arith.constant 0 : i32
    return %c0_i32, %arg0 : i32, i32
  }
  func.func @transform_1(%arg0: i32) -> (i32, i32) {
    %c0_i32 = arith.constant 0 : i32
    %c0_i32_0 = arith.constant 0 : i32
    %c0_i32_1 = arith.constant 0 : i32
    return %c0_i32, %c0_i32_0 : i32, i32
  }
  func.func @transform_2(%arg0: i32) -> (i32, i32) {
    %c0_i32 = arith.constant 0 : i32
    %c0_i32_0 = arith.constant 0 : i32
    %c0_i32_1 = arith.constant 0 : i32
    return %c0_i32, %c0_i32_0 : i32, i32
  }
  func.func @transform_3(%arg0: i32) -> (i32, i32) {
    %c0_i32 = arith.constant 0 : i32
    %c0_i32_0 = arith.constant 0 : i32
    return %c0_i32, %arg0 : i32, i32
  }
}

module attributes {stable_mosaic.version = 11 : i64} {
  func.func @_conv_pool_relu_kernel(%arg0: i32, %arg1: memref<200x512xf32, #tpu.memory_space<vmem>>, %arg2: memref<10x200xf32, #tpu.memory_space<vmem>>, %arg3: memref<10x1xf32, #tpu.memory_space<vmem>>, %arg4: memref<10x128xf32, #tpu.memory_space<vmem>>) attributes {dimension_semantics = [#tpu.dimension_semantics<parallel>], iteration_bounds = array<i64: 1>, scalar_prefetch = 0 : i64, scratch_operands = 0 : i64, tpu.core_type = #tpu.core_type<tc>, window_params = [{transform_indices = @transform_0, window_bounds = array<i64: 200, 512>}, {pipeline_mode = #tpu.pipeline_mode<synchronous>, transform_indices = @transform_1, window_bounds = array<i64: 10, 200>}, {pipeline_mode = #tpu.pipeline_mode<synchronous>, transform_indices = @transform_2, window_bounds = array<i64: 10, 1>}, {transform_indices = @transform_3, window_bounds = array<i64: 10, 128>}]} {
    %c0 = arith.constant 0 : index
    %c0_0 = arith.constant 0 : index
    %0 = vector.load %arg2[%c0, %c0_0] : memref<10x200xf32, #tpu.memory_space<vmem>>, vector<10x200xf32>
    %c0_1 = arith.constant 0 : index
    %c0_2 = arith.constant 0 : index
    %1 = vector.load %arg1[%c0_1, %c0_2] : memref<200x512xf32, #tpu.memory_space<vmem>>, vector<200x512xf32>
    %cst = arith.constant dense<0.000000e+00> : vector<10x512xf32>
    %2 = tpu.matmul %0, %1, %cst {dimension_numbers = #tpu.dot_dimension_numbers<[1], [0], [0], [1], [0, 0, 1, 1], [], []>} : vector<10x200xf32>, vector<200x512xf32>, vector<10x512xf32> -> vector<10x512xf32>
    %3 = vector.extract_strided_slice %2 {offsets = [0, 0], sizes = [10, 128], strides = [1, 1]} : vector<10x512xf32> to vector<10x128xf32>
    %4 = vector.extract_strided_slice %2 {offsets = [0, 128], sizes = [10, 128], strides = [1, 1]} : vector<10x512xf32> to vector<10x128xf32>
    %5 = arith.maximumf %3, %4 : vector<10x128xf32>
    %6 = vector.extract_strided_slice %2 {offsets = [0, 256], sizes = [10, 128], strides = [1, 1]} : vector<10x512xf32> to vector<10x128xf32>
    %7 = vector.extract_strided_slice %2 {offsets = [0, 384], sizes = [10, 128], strides = [1, 1]} : vector<10x512xf32> to vector<10x128xf32>
    %8 = arith.maximumf %6, %7 : vector<10x128xf32>
    %9 = arith.maximumf %5, %8 : vector<10x128xf32>
    %c0_3 = arith.constant 0 : index
    %c0_4 = arith.constant 0 : index
    %10 = vector.load %arg3[%c0_3, %c0_4] : memref<10x1xf32, #tpu.memory_space<vmem>>, vector<10x1xf32>
    %11 = vector.broadcast %10 : vector<10x1xf32> to vector<10x128xf32>
    %12 = arith.addf %9, %11 : vector<10x128xf32>
    %cst_5 = arith.constant 0.000000e+00 : f32
    %13 = vector.broadcast %cst_5 : f32 to vector<10x128xf32>
    %14 = arith.maximumf %12, %13 : vector<10x128xf32>
    %c0_6 = arith.constant 0 : index
    %c0_7 = arith.constant 0 : index
    %15 = vector.load %arg4[%c0_6, %c0_7] : memref<10x128xf32, #tpu.memory_space<vmem>>, vector<10x128xf32>
    tpu.vector_store %arg4[%c0_6, %c0_7], %14 {strides = array<i32>} : memref<10x128xf32, #tpu.memory_space<vmem>>, vector<10x128xf32>,
    return
  }
  func.func @transform_0(%arg0: i32) -> (i32, i32) {
    %c0_i32 = arith.constant 0 : i32
    %c0_i32_0 = arith.constant 0 : i32
    return %c0_i32, %arg0 : i32, i32
  }
  func.func @transform_1(%arg0: i32) -> (i32, i32) {
    %c0_i32 = arith.constant 0 : i32
    %c0_i32_0 = arith.constant 0 : i32
    %c0_i32_1 = arith.constant 0 : i32
    return %c0_i32, %c0_i32_0 : i32, i32
  }
  func.func @transform_2(%arg0: i32) -> (i32, i32) {
    %c0_i32 = arith.constant 0 : i32
    %c0_i32_0 = arith.constant 0 : i32
    %c0_i32_1 = arith.constant 0 : i32
    return %c0_i32, %c0_i32_0 : i32, i32
  }
  func.func @transform_3(%arg0: i32) -> (i32, i32) {
    %c0_i32 = arith.constant 0 : i32
    %c0_i32_0 = arith.constant 0 : i32
    return %c0_i32, %arg0 : i32, i32
  }
}

module attributes {stable_mosaic.version = 11 : i64} {
  func.func @_stn_sample_kernel(%arg0: i32, %arg1: i32, %arg2: memref<1x84x28xf32, #tpu.memory_space<vmem>>, %arg3: memref<1x1x90xf32, #tpu.memory_space<vmem>>, %arg4: memref<90x32xf32, #tpu.memory_space<vmem>>, %arg5: memref<1x32xf32, #tpu.memory_space<vmem>>, %arg6: memref<32x6xf32, #tpu.memory_space<vmem>>, %arg7: memref<1x6xf32, #tpu.memory_space<vmem>>, %arg8: memref<1x128xf32, #tpu.memory_space<vmem>>, %arg9: memref<1x128xf32, #tpu.memory_space<vmem>>, %arg10: memref<84x1xi32, #tpu.memory_space<vmem>>, %arg11: memref<3x84xf32, #tpu.memory_space<vmem>>, %arg12: memref<1x3x128xf32, #tpu.memory_space<vmem>>, %arg13: memref<1x6xf32, #tpu.memory_space<vmem>>) attributes {dimension_semantics = [#tpu.dimension_semantics<parallel>, #tpu.dimension_semantics<arbitrary>], iteration_bounds = array<i64: 2, 7>, scalar_prefetch = 0 : i64, scratch_operands = 1 : i64, tpu.core_type = #tpu.core_type<tc>, window_params = [{transform_indices = @transform_0, window_bounds = array<i64: 1, 84, 28>}, {transform_indices = @transform_1, window_bounds = array<i64: 1, 1, 90>}, {pipeline_mode = #tpu.pipeline_mode<synchronous>, transform_indices = @transform_2, window_bounds = array<i64: 90, 32>}, {pipeline_mode = #tpu.pipeline_mode<synchronous>, transform_indices = @transform_3, window_bounds = array<i64: 1, 32>}, {pipeline_mode = #tpu.pipeline_mode<synchronous>, transform_indices = @transform_4, window_bounds = array<i64: 32, 6>}, {pipeline_mode = #tpu.pipeline_mode<synchronous>, transform_indices = @transform_5, window_bounds = array<i64: 1, 6>}, {transform_indices = @transform_6, window_bounds = array<i64: 1, 128>}, {transform_indices = @transform_7, window_bounds = array<i64: 1, 128>}, {pipeline_mode = #tpu.pipeline_mode<synchronous>, transform_indices = @transform_8, window_bounds = array<i64: 84, 1>}, {pipeline_mode = #tpu.pipeline_mode<synchronous>, transform_indices = @transform_9, window_bounds = array<i64: 3, 84>}, {transform_indices = @transform_10, window_bounds = array<i64: 1, 3, 128>}]} {
    %c0_i32 = arith.constant 0 : i32
    %0 = arith.cmpi eq, %arg1, %c0_i32 : i32
    %1 = arith.extui %0 : i1 to i32
    %c0_i32_0 = arith.constant 0 : i32
    %2 = arith.cmpi ne, %1, %c0_i32_0 : i32
    scf.if %2 {
      %c0_39 = arith.constant 0 : index
      %c0_40 = arith.constant 0 : index
      %c0_41 = arith.constant 0 : index
      %123 = vector.load %arg3[%c0_39, %c0_40, %c0_41] : memref<1x1x90xf32, #tpu.memory_space<vmem>>, vector<1x1x90xf32>
      %124 = vector.shape_cast %123 : vector<1x1x90xf32> to vector<1x90xf32>
      %c0_42 = arith.constant 0 : index
      %c0_43 = arith.constant 0 : index
      %125 = vector.load %arg4[%c0_42, %c0_43] : memref<90x32xf32, #tpu.memory_space<vmem>>, vector<90x32xf32>
      %cst_44 = arith.constant dense<0.000000e+00> : vector<1x32xf32>
      %126 = tpu.matmul %124, %125, %cst_44 {dimension_numbers = #tpu.dot_dimension_numbers<[1], [0], [0], [1], [0, 0, 1, 1], [], []>} : vector<1x90xf32>, vector<90x32xf32>, vector<1x32xf32> -> vector<1x32xf32>
      %c0_45 = arith.constant 0 : index
      %c0_46 = arith.constant 0 : index
      %127 = vector.load %arg5[%c0_45, %c0_46] : memref<1x32xf32, #tpu.memory_space<vmem>>, vector<1x32xf32>
      %128 = arith.addf %126, %127 : vector<1x32xf32>
      %cst_47 = arith.constant 0.000000e+00 : f32
      %129 = vector.broadcast %cst_47 : f32 to vector<1x32xf32>
      %130 = arith.maximumf %128, %129 : vector<1x32xf32>
      %c0_48 = arith.constant 0 : index
      %c0_49 = arith.constant 0 : index
      %131 = vector.load %arg6[%c0_48, %c0_49] : memref<32x6xf32, #tpu.memory_space<vmem>>, vector<32x6xf32>
      %cst_50 = arith.constant dense<0.000000e+00> : vector<1x6xf32>
      %132 = tpu.matmul %130, %131, %cst_50 {dimension_numbers = #tpu.dot_dimension_numbers<[1], [0], [0], [1], [0, 0, 1, 1], [], []>} : vector<1x32xf32>, vector<32x6xf32>, vector<1x6xf32> -> vector<1x6xf32>
      %c0_51 = arith.constant 0 : index
      %c0_52 = arith.constant 0 : index
      %133 = vector.load %arg7[%c0_51, %c0_52] : memref<1x6xf32, #tpu.memory_space<vmem>>, vector<1x6xf32>
      %134 = arith.addf %132, %133 : vector<1x6xf32>
      %c0_53 = arith.constant 0 : index
      %c0_54 = arith.constant 0 : index
      %135 = vector.load %arg13[%c0_53, %c0_54] : memref<1x6xf32, #tpu.memory_space<vmem>>, vector<1x6xf32>
      tpu.vector_store %arg13[%c0_53, %c0_54], %134 {strides = array<i32>} : memref<1x6xf32, #tpu.memory_space<vmem>>, vector<1x6xf32>,
    } else {
    }
    %c0 = arith.constant 0 : index
    %c0_1 = arith.constant 0 : index
    %3 = vector.load %arg13[%c0, %c0_1] : memref<1x6xf32, #tpu.memory_space<vmem>>, vector<1x6xf32>
    %c0_2 = arith.constant 0 : index
    %c0_3 = arith.constant 0 : index
    %4 = vector.load %arg8[%c0_2, %c0_3] : memref<1x128xf32, #tpu.memory_space<vmem>>, vector<1x128xf32>
    %c0_4 = arith.constant 0 : index
    %c0_5 = arith.constant 0 : index
    %5 = vector.load %arg9[%c0_4, %c0_5] : memref<1x128xf32, #tpu.memory_space<vmem>>, vector<1x128xf32>
    %6 = vector.extract_strided_slice %3 {offsets = [0, 0], sizes = [1, 1], strides = [1, 1]} : vector<1x6xf32> to vector<1x1xf32>
    %7 = vector.broadcast %6 : vector<1x1xf32> to vector<1x128xf32>
    %8 = arith.mulf %7, %4 : vector<1x128xf32>
    %9 = vector.extract_strided_slice %3 {offsets = [0, 1], sizes = [1, 1], strides = [1, 1]} : vector<1x6xf32> to vector<1x1xf32>
    %10 = vector.broadcast %9 : vector<1x1xf32> to vector<1x128xf32>
    %11 = arith.mulf %10, %5 : vector<1x128xf32>
    %12 = arith.addf %8, %11 : vector<1x128xf32>
    %13 = vector.extract_strided_slice %3 {offsets = [0, 2], sizes = [1, 1], strides = [1, 1]} : vector<1x6xf32> to vector<1x1xf32>
    %14 = vector.broadcast %13 : vector<1x1xf32> to vector<1x128xf32>
    %15 = arith.addf %12, %14 : vector<1x128xf32>
    %16 = vector.extract_strided_slice %3 {offsets = [0, 3], sizes = [1, 1], strides = [1, 1]} : vector<1x6xf32> to vector<1x1xf32>
    %17 = vector.broadcast %16 : vector<1x1xf32> to vector<1x128xf32>
    %18 = arith.mulf %17, %4 : vector<1x128xf32>
    %19 = vector.extract_strided_slice %3 {offsets = [0, 4], sizes = [1, 1], strides = [1, 1]} : vector<1x6xf32> to vector<1x1xf32>
    %20 = vector.broadcast %19 : vector<1x1xf32> to vector<1x128xf32>
    %21 = arith.mulf %20, %5 : vector<1x128xf32>
    %22 = arith.addf %18, %21 : vector<1x128xf32>
    %23 = vector.extract_strided_slice %3 {offsets = [0, 5], sizes = [1, 1], strides = [1, 1]} : vector<1x6xf32> to vector<1x1xf32>
    %24 = vector.broadcast %23 : vector<1x1xf32> to vector<1x128xf32>
    %25 = arith.addf %22, %24 : vector<1x128xf32>
    %cst = arith.constant 1.000000e+00 : f32
    %26 = vector.broadcast %cst : f32 to vector<1x128xf32>
    %27 = arith.addf %15, %26 : vector<1x128xf32>
    %cst_6 = arith.constant 2.800000e+01 : f32
    %28 = vector.broadcast %cst_6 : f32 to vector<1x128xf32>
    %29 = arith.mulf %27, %28 : vector<1x128xf32>
    %cst_7 = arith.constant 1.000000e+00 : f32
    %30 = vector.broadcast %cst_7 : f32 to vector<1x128xf32>
    %31 = arith.subf %29, %30 : vector<1x128xf32>
    %cst_8 = arith.constant 5.000000e-01 : f32
    %32 = vector.broadcast %cst_8 : f32 to vector<1x128xf32>
    %33 = arith.mulf %31, %32 : vector<1x128xf32>
    %cst_9 = arith.constant 1.000000e+00 : f32
    %34 = vector.broadcast %cst_9 : f32 to vector<1x128xf32>
    %35 = arith.addf %25, %34 : vector<1x128xf32>
    %cst_10 = arith.constant 2.800000e+01 : f32
    %36 = vector.broadcast %cst_10 : f32 to vector<1x128xf32>
    %37 = arith.mulf %35, %36 : vector<1x128xf32>
    %cst_11 = arith.constant 1.000000e+00 : f32
    %38 = vector.broadcast %cst_11 : f32 to vector<1x128xf32>
    %39 = arith.subf %37, %38 : vector<1x128xf32>
    %cst_12 = arith.constant 5.000000e-01 : f32
    %40 = vector.broadcast %cst_12 : f32 to vector<1x128xf32>
    %41 = arith.mulf %39, %40 : vector<1x128xf32>
    %42 = math.floor %33 : vector<1x128xf32>
    %43 = math.floor %41 : vector<1x128xf32>
    %44 = arith.subf %33, %42 : vector<1x128xf32>
    %cst_13 = arith.constant 1.000000e+00 : f32
    %45 = vector.broadcast %cst_13 : f32 to vector<1x128xf32>
    %46 = arith.subf %45, %44 : vector<1x128xf32>
    %47 = arith.subf %41, %43 : vector<1x128xf32>
    %cst_14 = arith.constant 1.000000e+00 : f32
    %48 = vector.broadcast %cst_14 : f32 to vector<1x128xf32>
    %49 = arith.subf %48, %47 : vector<1x128xf32>
    %50 = arith.fptosi %42 : vector<1x128xf32> to vector<1x128xi32>
    %c1_i32 = arith.constant 1 : i32
    %51 = vector.broadcast %c1_i32 : i32 to vector<1x128xi32>
    %52 = arith.addi %50, %51 : vector<1x128xi32>
    %53 = arith.fptosi %43 : vector<1x128xf32> to vector<1x128xi32>
    %c1_i32_15 = arith.constant 1 : i32
    %54 = vector.broadcast %c1_i32_15 : i32 to vector<1x128xi32>
    %55 = arith.addi %53, %54 : vector<1x128xi32>
    %c0_i32_16 = arith.constant 0 : i32
    %56 = vector.broadcast %c0_i32_16 : i32 to vector<1x128xi32>
    %57 = arith.cmpi sge, %50, %56 : vector<1x128xi32>
    %c27_i32 = arith.constant 27 : i32
    %58 = vector.broadcast %c27_i32 : i32 to vector<1x128xi32>
    %59 = arith.cmpi sle, %50, %58 : vector<1x128xi32>
    %60 = arith.andi %57, %59 : vector<1x128xi1>
    %c0_i32_17 = arith.constant 0 : i32
    %61 = vector.broadcast %c0_i32_17 : i32 to vector<1x128xi32>
    %62 = arith.cmpi sge, %52, %61 : vector<1x128xi32>
    %c27_i32_18 = arith.constant 27 : i32
    %63 = vector.broadcast %c27_i32_18 : i32 to vector<1x128xi32>
    %64 = arith.cmpi sle, %52, %63 : vector<1x128xi32>
    %65 = arith.andi %62, %64 : vector<1x128xi1>
    %c0_i32_19 = arith.constant 0 : i32
    %66 = vector.broadcast %c0_i32_19 : i32 to vector<1x128xi32>
    %67 = arith.cmpi sge, %53, %66 : vector<1x128xi32>
    %c27_i32_20 = arith.constant 27 : i32
    %68 = vector.broadcast %c27_i32_20 : i32 to vector<1x128xi32>
    %69 = arith.cmpi sle, %53, %68 : vector<1x128xi32>
    %70 = arith.andi %67, %69 : vector<1x128xi1>
    %c0_i32_21 = arith.constant 0 : i32
    %71 = vector.broadcast %c0_i32_21 : i32 to vector<1x128xi32>
    %72 = arith.cmpi sge, %55, %71 : vector<1x128xi32>
    %c27_i32_22 = arith.constant 27 : i32
    %73 = vector.broadcast %c27_i32_22 : i32 to vector<1x128xi32>
    %74 = arith.cmpi sle, %55, %73 : vector<1x128xi32>
    %75 = arith.andi %72, %74 : vector<1x128xi1>
    %76 = tpu.iota {dimensions = array<i32: 0>} : vector<28x128xi32>
    %77 = vector.broadcast %50 : vector<1x128xi32> to vector<28x128xi32>
    %78 = arith.cmpi eq, %76, %77 : vector<28x128xi32>
    %79 = vector.broadcast %60 : vector<1x128xi1> to vector<28x128xi1>
    %80 = arith.andi %78, %79 : vector<28x128xi1>
    %cst_23 = arith.constant 0.000000e+00 : f32
    %81 = vector.shape_cast %46 : vector<1x128xf32> to vector<1x128xf32>
    %82 = vector.broadcast %81 : vector<1x128xf32> to vector<28x128xf32>
    %83 = vector.broadcast %cst_23 : f32 to vector<28x128xf32>
    %84 = arith.select %80, %82, %83 : vector<28x128xi1>, vector<28x128xf32>
    %85 = vector.broadcast %52 : vector<1x128xi32> to vector<28x128xi32>
    %86 = arith.cmpi eq, %76, %85 : vector<28x128xi32>
    %87 = vector.broadcast %65 : vector<1x128xi1> to vector<28x128xi1>
    %88 = arith.andi %86, %87 : vector<28x128xi1>
    %cst_24 = arith.constant 0.000000e+00 : f32
    %89 = vector.shape_cast %44 : vector<1x128xf32> to vector<1x128xf32>
    %90 = vector.broadcast %89 : vector<1x128xf32> to vector<28x128xf32>
    %91 = vector.broadcast %cst_24 : f32 to vector<28x128xf32>
    %92 = arith.select %88, %90, %91 : vector<28x128xi1>, vector<28x128xf32>
    %93 = arith.addf %84, %92 : vector<28x128xf32>
    %c0_25 = arith.constant 0 : index
    %c0_26 = arith.constant 0 : index
    %94 = vector.load %arg10[%c0_25, %c0_26] : memref<84x1xi32, #tpu.memory_space<vmem>>, vector<84x1xi32>
    %95 = vector.broadcast %94 : vector<84x1xi32> to vector<84x128xi32>
    %96 = vector.broadcast %53 : vector<1x128xi32> to vector<84x128xi32>
    %97 = arith.cmpi eq, %95, %96 : vector<84x128xi32>
    %98 = vector.broadcast %70 : vector<1x128xi1> to vector<84x128xi1>
    %99 = arith.andi %97, %98 : vector<84x128xi1>
    %cst_27 = arith.constant 0.000000e+00 : f32
    %100 = vector.shape_cast %49 : vector<1x128xf32> to vector<1x128xf32>
    %101 = vector.broadcast %100 : vector<1x128xf32> to vector<84x128xf32>
    %102 = vector.broadcast %cst_27 : f32 to vector<84x128xf32>
    %103 = arith.select %99, %101, %102 : vector<84x128xi1>, vector<84x128xf32>
    %104 = vector.broadcast %94 : vector<84x1xi32> to vector<84x128xi32>
    %105 = vector.broadcast %55 : vector<1x128xi32> to vector<84x128xi32>
    %106 = arith.cmpi eq, %104, %105 : vector<84x128xi32>
    %107 = vector.broadcast %75 : vector<1x128xi1> to vector<84x128xi1>
    %108 = arith.andi %106, %107 : vector<84x128xi1>
    %cst_28 = arith.constant 0.000000e+00 : f32
    %109 = vector.shape_cast %47 : vector<1x128xf32> to vector<1x128xf32>
    %110 = vector.broadcast %109 : vector<1x128xf32> to vector<84x128xf32>
    %111 = vector.broadcast %cst_28 : f32 to vector<84x128xf32>
    %112 = arith.select %108, %110, %111 : vector<84x128xi1>, vector<84x128xf32>
    %113 = arith.addf %103, %112 : vector<84x128xf32>
    %c0_29 = arith.constant 0 : index
    %c0_30 = arith.constant 0 : index
    %c0_31 = arith.constant 0 : index
    %114 = vector.load %arg2[%c0_29, %c0_30, %c0_31] : memref<1x84x28xf32, #tpu.memory_space<vmem>>, vector<1x84x28xf32>
    %115 = vector.shape_cast %114 : vector<1x84x28xf32> to vector<84x28xf32>
    %cst_32 = arith.constant dense<0.000000e+00> : vector<84x128xf32>
    %116 = tpu.matmul %115, %93, %cst_32 {dimension_numbers = #tpu.dot_dimension_numbers<[1], [0], [0], [1], [0, 0, 1, 1], [], []>} : vector<84x28xf32>, vector<28x128xf32>, vector<84x128xf32> -> vector<84x128xf32>
    %c0_33 = arith.constant 0 : index
    %c0_34 = arith.constant 0 : index
    %117 = vector.load %arg11[%c0_33, %c0_34] : memref<3x84xf32, #tpu.memory_space<vmem>>, vector<3x84xf32>
    %118 = arith.mulf %116, %113 : vector<84x128xf32>
    %cst_35 = arith.constant dense<0.000000e+00> : vector<3x128xf32>
    %119 = tpu.matmul %117, %118, %cst_35 {dimension_numbers = #tpu.dot_dimension_numbers<[1], [0], [0], [1], [0, 0, 1, 1], [], []>} : vector<3x84xf32>, vector<84x128xf32>, vector<3x128xf32> -> vector<3x128xf32>
    %c0_36 = arith.constant 0 : index
    %c0_37 = arith.constant 0 : index
    %c0_38 = arith.constant 0 : index
    %120 = vector.load %arg12[%c0_36, %c0_37, %c0_38] : memref<1x3x128xf32, #tpu.memory_space<vmem>>, vector<1x3x128xf32>
    %121 = vector.shape_cast %120 : vector<1x3x128xf32> to vector<3x128xf32>
    %122 = vector.shape_cast %119 : vector<3x128xf32> to vector<1x3x128xf32>
    tpu.vector_store %arg12[%c0_36, %c0_37, %c0_38], %122 {strides = array<i32>} : memref<1x3x128xf32, #tpu.memory_space<vmem>>, vector<1x3x128xf32>,
    return
  }
  func.func @transform_0(%arg0: i32, %arg1: i32) -> (i32, i32, i32) {
    %c0_i32 = arith.constant 0 : i32
    %c0_i32_0 = arith.constant 0 : i32
    %c0_i32_1 = arith.constant 0 : i32
    return %arg0, %c0_i32, %c0_i32_0 : i32, i32, i32
  }
  func.func @transform_1(%arg0: i32, %arg1: i32) -> (i32, i32, i32) {
    %c0_i32 = arith.constant 0 : i32
    %c0_i32_0 = arith.constant 0 : i32
    %c0_i32_1 = arith.constant 0 : i32
    return %arg0, %c0_i32, %c0_i32_0 : i32, i32, i32
  }
  func.func @transform_2(%arg0: i32, %arg1: i32) -> (i32, i32) {
    %c0_i32 = arith.constant 0 : i32
    %c0_i32_0 = arith.constant 0 : i32
    %c0_i32_1 = arith.constant 0 : i32
    return %c0_i32, %c0_i32_0 : i32, i32
  }
  func.func @transform_3(%arg0: i32, %arg1: i32) -> (i32, i32) {
    %c0_i32 = arith.constant 0 : i32
    %c0_i32_0 = arith.constant 0 : i32
    %c0_i32_1 = arith.constant 0 : i32
    return %c0_i32, %c0_i32_0 : i32, i32
  }
  func.func @transform_4(%arg0: i32, %arg1: i32) -> (i32, i32) {
    %c0_i32 = arith.constant 0 : i32
    %c0_i32_0 = arith.constant 0 : i32
    %c0_i32_1 = arith.constant 0 : i32
    return %c0_i32, %c0_i32_0 : i32, i32
  }
  func.func @transform_5(%arg0: i32, %arg1: i32) -> (i32, i32) {
    %c0_i32 = arith.constant 0 : i32
    %c0_i32_0 = arith.constant 0 : i32
    %c0_i32_1 = arith.constant 0 : i32
    return %c0_i32, %c0_i32_0 : i32, i32
  }
  func.func @transform_6(%arg0: i32, %arg1: i32) -> (i32, i32) {
    %c0_i32 = arith.constant 0 : i32
    %c0_i32_0 = arith.constant 0 : i32
    return %c0_i32, %arg1 : i32, i32
  }
  func.func @transform_7(%arg0: i32, %arg1: i32) -> (i32, i32) {
    %c0_i32 = arith.constant 0 : i32
    %c0_i32_0 = arith.constant 0 : i32
    return %c0_i32, %arg1 : i32, i32
  }
  func.func @transform_8(%arg0: i32, %arg1: i32) -> (i32, i32) {
    %c0_i32 = arith.constant 0 : i32
    %c0_i32_0 = arith.constant 0 : i32
    %c0_i32_1 = arith.constant 0 : i32
    return %c0_i32, %c0_i32_0 : i32, i32
  }
  func.func @transform_9(%arg0: i32, %arg1: i32) -> (i32, i32) {
    %c0_i32 = arith.constant 0 : i32
    %c0_i32_0 = arith.constant 0 : i32
    %c0_i32_1 = arith.constant 0 : i32
    return %c0_i32, %c0_i32_0 : i32, i32
  }
  func.func @transform_10(%arg0: i32, %arg1: i32) -> (i32, i32, i32) {
    %c0_i32 = arith.constant 0 : i32
    %c0_i32_0 = arith.constant 0 : i32
    return %arg0, %c0_i32, %arg1 : i32, i32, i32
  }
}

</mosaic_0001>

<llo_original>
// kernel: stn_forward.3
$region0: #{stn_forward.3}
  #allocation0 [shape = 'u32[]', space=smem, size = 0x4, offset = 0x4, fixed_abs, tag = 'smem constant byte address 0x4 - core index']
  #allocation1 [shape = 'u32[144,128]{1,0:T(1,128)}', space=vmem, size = 0x12000, scoped, tag = 'internal scratch']
  %s0 = inlined_call_operand.vmem [shape: f32[152,1024], index: 0, kind: input, shape index: {}]
  %s1 = inlined_call_operand.vmem [shape: f32[8,152], index: 1, kind: input, shape index: {}]
  %s2 = inlined_call_operand.vmem [shape: f32[8,1], index: 2, kind: input, shape index: {}]
  %s3 = inlined_call_operand.vmem [shape: f32[8,256], index: 3, kind: output, shape index: {}]
  %s4 = sld [smem:[#allocation0]]
  $region22: #{stn_forward.3} parent=0
    _
  %s6 = ssub.s32 1, %s4
  %s7 = scalar_select 0, %s6, %s4
  // Predicated region
  $region2: #{stn_forward.3} parent=0 // pred_check
    _
  $region3: #{stn_forward.3} parent=0 // pred_check_branch
    %9 = sbr.rel (0) target = $region5
  $region4: #{stn_forward.3} parent=0 // pred_region
    _
  $region5: #{stn_forward.3} parent=0 // pred_fallthru
    _
  // Predicated region
  $region6: #{stn_forward.3} parent=0 // pred_check
    _
  $region7: #{stn_forward.3} parent=0 // pred_check_branch
    %11 = sbr.rel (0) target = $region9
  $region8: #{stn_forward.3} parent=0 // pred_region
    _
  $region9: #{stn_forward.3} parent=0 // pred_fallthru
    _
  // Predicated region
  $region10: #{stn_forward.3} parent=0 // pred_check
    _
  $region11: #{stn_forward.3} parent=0 // pred_check_branch
    %13 = sbr.rel (0) target = $region13
  $region12: #{stn_forward.3} parent=0 // pred_region
    _
  $region13: #{stn_forward.3} parent=0 // pred_fallthru
    _
  %v14 = vld [vmem:[%s1] sm:$0xff]
  %v15 = vld [vmem:[%s1 + $0x8] sm:$0xff]
  %v16 = vld [vmem:[%s0] sm:$0xff]
  %v17 = vld [vmem:[%s0 + $0x8] sm:$0xff]
  %v18 = vld [vmem:[%s0 + $0x10] sm:$0xff]
  %v19 = vld [vmem:[%s0 + $0x18] sm:$0xff]
  %v20 = vld [vmem:[%s0 + $0x20] sm:$0xff]
  %v21 = vld [vmem:[%s0 + $0x28] sm:$0xff]
  %v22 = vld [vmem:[%s0 + $0x30] sm:$0xff]
  %v23 = vld [vmem:[%s0 + $0x38] sm:$0xff]
  %v24 = vld [vmem:[%s0 + $0x40] sm:$0xff]
  %v25 = vld [vmem:[%s0 + $0x48] sm:$0xff]
  %v26 = vld [vmem:[%s0 + $0x50] sm:$0xff]
  %v27 = vld [vmem:[%s0 + $0x58] sm:$0xff]
  %v28 = vld [vmem:[%s0 + $0x60] sm:$0xff]
  %v29 = vld [vmem:[%s0 + $0x68] sm:$0xff]
  %v30 = vld [vmem:[%s0 + $0x70] sm:$0xff]
  %v31 = vld [vmem:[%s0 + $0x78] sm:$0xff]
  %v32 = vld [vmem:[%s0 + $0x80] sm:$0xff]
  %v33 = vld [vmem:[%s0 + $0x88] sm:$0xff]
  %v34 = vld [vmem:[%s0 + $0x90] sm:$0xff]
  %v35 = vld [vmem:[%s0 + $0x98] sm:$0xff]
  %v36 = vld [vmem:[%s0 + $0xa0] sm:$0xff]
  %v37 = vld [vmem:[%s0 + $0xa8] sm:$0xff]
  %v38 = vld [vmem:[%s0 + $0xb0] sm:$0xff]
  %v39 = vld [vmem:[%s0 + $0xb8] sm:$0xff]
  %v40 = vld [vmem:[%s0 + $0xc0] sm:$0xff]
  %v41 = vld [vmem:[%s0 + $0xc8] sm:$0xff]
  %v42 = vld [vmem:[%s0 + $0xd0] sm:$0xff]
  %v43 = vld [vmem:[%s0 + $0xd8] sm:$0xff]
  %v44 = vld [vmem:[%s0 + $0xe0] sm:$0xff]
  %v45 = vld [vmem:[%s0 + $0xe8] sm:$0xff]
  %v46 = vld [vmem:[%s0 + $0xf0] sm:$0xff]
  %v47 = vld [vmem:[%s0 + $0xf8] sm:$0xff]
  %v48 = vld [vmem:[%s0 + $0x100] sm:$0xff]
  %v49 = vld [vmem:[%s0 + $0x108] sm:$0xff]
  %v50 = vld [vmem:[%s0 + $0x110] sm:$0xff]
  %v51 = vld [vmem:[%s0 + $0x118] sm:$0xff]
  %v52 = vld [vmem:[%s0 + $0x120] sm:$0xff]
  %v53 = vld [vmem:[%s0 + $0x128] sm:$0xff]
  %v54 = vld [vmem:[%s0 + $0x130] sm:$0xff]
  %v55 = vld [vmem:[%s0 + $0x138] sm:$0xff]
  %v56 = vld [vmem:[%s0 + $0x140] sm:$0xff]
  %v57 = vld [vmem:[%s0 + $0x148] sm:$0xff]
  %v58 = vld [vmem:[%s0 + $0x150] sm:$0xff]
  %v59 = vld [vmem:[%s0 + $0x158] sm:$0xff]
  %v60 = vld [vmem:[%s0 + $0x160] sm:$0xff]
  %v61 = vld [vmem:[%s0 + $0x168] sm:$0xff]
  %v62 = vld [vmem:[%s0 + $0x170] sm:$0xff]
  %v63 = vld [vmem:[%s0 + $0x178] sm:$0xff]
  %v64 = vld [vmem:[%s0 + $0x180] sm:$0xff]
  %v65 = vld [vmem:[%s0 + $0x188] sm:$0xff]
  %v66 = vld [vmem:[%s0 + $0x190] sm:$0xff]
  %v67 = vld [vmem:[%s0 + $0x198] sm:$0xff]
  %v68 = vld [vmem:[%s0 + $0x1a0] sm:$0xff]
  %v69 = vld [vmem:[%s0 + $0x1a8] sm:$0xff]
  %v70 = vld [vmem:[%s0 + $0x1b0] sm:$0xff]
  %v71 = vld [vmem:[%s0 + $0x1b8] sm:$0xff]
  %v72 = vld [vmem:[%s0 + $0x1c0] sm:$0xff]
  %v73 = vld [vmem:[%s0 + $0x1c8] sm:$0xff]
  %v74 = vld [vmem:[%s0 + $0x1d0] sm:$0xff]
  %v75 = vld [vmem:[%s0 + $0x1d8] sm:$0xff]
  %v76 = vld [vmem:[%s0 + $0x1e0] sm:$0xff]
  %v77 = vld [vmem:[%s0 + $0x1e8] sm:$0xff]
  %v78 = vld [vmem:[%s0 + $0x1f0] sm:$0xff]
  %v79 = vld [vmem:[%s0 + $0x1f8] sm:$0xff]
  %v80 = vld [vmem:[%s0 + $0x200] sm:$0xff]
  %v81 = vld [vmem:[%s0 + $0x208] sm:$0xff]
  %v82 = vld [vmem:[%s0 + $0x210] sm:$0xff]
  %v83 = vld [vmem:[%s0 + $0x218] sm:$0xff]
  %v84 = vld [vmem:[%s0 + $0x220] sm:$0xff]
  %v85 = vld [vmem:[%s0 + $0x228] sm:$0xff]
  %v86 = vld [vmem:[%s0 + $0x230] sm:$0xff]
  %v87 = vld [vmem:[%s0 + $0x238] sm:$0xff]
  %v88 = vld [vmem:[%s0 + $0x240] sm:$0xff]
  %v89 = vld [vmem:[%s0 + $0x248] sm:$0xff]
  %v90 = vld [vmem:[%s0 + $0x250] sm:$0xff]
  %v91 = vld [vmem:[%s0 + $0x258] sm:$0xff]
  %v92 = vld [vmem:[%s0 + $0x260] sm:$0xff]
  %v93 = vld [vmem:[%s0 + $0x268] sm:$0xff]
  %v94 = vld [vmem:[%s0 + $0x270] sm:$0xff]
  %v95 = vld [vmem:[%s0 + $0x278] sm:$0xff]
  %v96 = vld [vmem:[%s0 + $0x280] sm:$0xff]
  %v97 = vld [vmem:[%s0 + $0x288] sm:$0xff]
  %v98 = vld [vmem:[%s0 + $0x290] sm:$0xff]
  %v99 = vld [vmem:[%s0 + $0x298] sm:$0xff]
  %v100 = vld [vmem:[%s0 + $0x2a0] sm:$0xff]
  %v101 = vld [vmem:[%s0 + $0x2a8] sm:$0xff]
  %v102 = vld [vmem:[%s0 + $0x2b0] sm:$0xff]
  %v103 = vld [vmem:[%s0 + $0x2b8] sm:$0xff]
  %v104 = vld [vmem:[%s0 + $0x2c0] sm:$0xff]
  %v105 = vld [vmem:[%s0 + $0x2c8] sm:$0xff]
  %v106 = vld [vmem:[%s0 + $0x2d0] sm:$0xff]
  %v107 = vld [vmem:[%s0 + $0x2d8] sm:$0xff]
  %v108 = vld [vmem:[%s0 + $0x2e0] sm:$0xff]
  %v109 = vld [vmem:[%s0 + $0x2e8] sm:$0xff]
  %v110 = vld [vmem:[%s0 + $0x2f0] sm:$0xff]
  %v111 = vld [vmem:[%s0 + $0x2f8] sm:$0xff]
  %v112 = vld [vmem:[%s0 + $0x300] sm:$0xff]
  %v113 = vld [vmem:[%s0 + $0x308] sm:$0xff]
  %v114 = vld [vmem:[%s0 + $0x310] sm:$0xff]
  %v115 = vld [vmem:[%s0 + $0x318] sm:$0xff]
  %v116 = vld [vmem:[%s0 + $0x320] sm:$0xff]
  %v117 = vld [vmem:[%s0 + $0x328] sm:$0xff]
  %v118 = vld [vmem:[%s0 + $0x330] sm:$0xff]
  %v119 = vld [vmem:[%s0 + $0x338] sm:$0xff]
  %v120 = vld [vmem:[%s0 + $0x340] sm:$0xff]
  %v121 = vld [vmem:[%s0 + $0x348] sm:$0xff]
  %v122 = vld [vmem:[%s0 + $0x350] sm:$0xff]
  %v123 = vld [vmem:[%s0 + $0x358] sm:$0xff]
  %v124 = vld [vmem:[%s0 + $0x360] sm:$0xff]
  %v125 = vld [vmem:[%s0 + $0x368] sm:$0xff]
  %v126 = vld [vmem:[%s0 + $0x370] sm:$0xff]
  %v127 = vld [vmem:[%s0 + $0x378] sm:$0xff]
  %v128 = vld [vmem:[%s0 + $0x380] sm:$0xff]
  %v129 = vld [vmem:[%s0 + $0x388] sm:$0xff]
  %v130 = vld [vmem:[%s0 + $0x390] sm:$0xff]
  %v131 = vld [vmem:[%s0 + $0x398] sm:$0xff]
  %v132 = vld [vmem:[%s0 + $0x3a0] sm:$0xff]
  %v133 = vld [vmem:[%s0 + $0x3a8] sm:$0xff]
  %v134 = vld [vmem:[%s0 + $0x3b0] sm:$0xff]
  %v135 = vld [vmem:[%s0 + $0x3b8] sm:$0xff]
  %v136 = vld [vmem:[%s0 + $0x3c0] sm:$0xff]
  %v137 = vld [vmem:[%s0 + $0x3c8] sm:$0xff]
  %v138 = vld [vmem:[%s0 + $0x3d0] sm:$0xff]
  %v139 = vld [vmem:[%s0 + $0x3d8] sm:$0xff]
  %v140 = vld [vmem:[%s0 + $0x3e0] sm:$0xff]
  %v141 = vld [vmem:[%s0 + $0x3e8] sm:$0xff]
  %v142 = vld [vmem:[%s0 + $0x3f0] sm:$0xff]
  %v143 = vld [vmem:[%s0 + $0x3f8] sm:$0xff]
  %v144 = vld [vmem:[%s0 + $0x400] sm:$0xff]
  %v145 = vld [vmem:[%s0 + $0x408] sm:$0xff]
  %v146 = vld [vmem:[%s0 + $0x410] sm:$0xff]
  %v147 = vld [vmem:[%s0 + $0x418] sm:$0xff]
  %v148 = vld [vmem:[%s0 + $0x420] sm:$0xff]
  %v149 = vld [vmem:[%s0 + $0x428] sm:$0xff]
  %v150 = vld [vmem:[%s0 + $0x430] sm:$0xff]
  %v151 = vld [vmem:[%s0 + $0x438] sm:$0xff]
  %v152 = vld [vmem:[%s0 + $0x440] sm:$0xff]
  %v153 = vld [vmem:[%s0 + $0x448] sm:$0xff]
  %v154 = vld [vmem:[%s0 + $0x450] sm:$0xff]
  %v155 = vld [vmem:[%s0 + $0x458] sm:$0xff]
  %v156 = vld [vmem:[%s0 + $0x460] sm:$0xff]
  %v157 = vld [vmem:[%s0 + $0x468] sm:$0xff]
  %v158 = vld [vmem:[%s0 + $0x470] sm:$0xff]
  %v159 = vld [vmem:[%s0 + $0x478] sm:$0xff]
  %v160 = vld [vmem:[%s0 + $0x480] sm:$0xff]
  %v161 = vld [vmem:[%s0 + $0x488] sm:$0xff]
  %v162 = vld [vmem:[%s0 + $0x490] sm:$0xff]
  %v163 = vld [vmem:[%s0 + $0x498] sm:$0xff]
  %v164 = vld [vmem:[%s0 + $0x4a0] sm:$0xff]
  %v165 = vld [vmem:[%s0 + $0x4a8] sm:$0xff]
  %v166 = vld [vmem:[%s0 + $0x4b0] sm:$0xff]
  %v167 = vld [vmem:[%s0 + $0x4b8] sm:$0xff]
  %vm168 = vcmask 195584
  %v170 = vsel %vm168, %v15, 0
  %172 = vmatprep.subr.mxu0 %v17
  %173 = vmatpush1.msra.mxu0 %v16
  %174 = vmatprep.subr.mxu0 %v25
  %175 = vmatpush1.msra.mxu0 %v24
  %176 = vmatprep.subr.mxu0 %v33
  %177 = vmatpush1.msra.mxu0 %v32
  %178 = vmatprep.subr.mxu0 %v41
  %179 = vmatpush1.msra.mxu0 %v40
  %180 = vmatprep.subr.mxu0 %v49
  %181 = vmatpush1.msra.mxu0 %v48
  %182 = vmatprep.subr.mxu0 %v57
  %183 = vmatpush1.msra.mxu0 %v56
  %184 = vmatprep.subr.mxu0 %v65
  %185 = vmatpush1.msra.mxu0 %v64
  %186 = vmatprep.subr.mxu0 %v73
  %187 = vmatpush1.msra.mxu0 %v72
  %188 = vmatprep.subr.mxu0 %v81
  %189 = vmatpush1.msra.mxu0 %v80
  %190 = vmatprep.subr.mxu0 %v89
  %191 = vmatpush1.msra.mxu0 %v88
  %192 = vmatprep.subr.mxu0 %v97
  %193 = vmatpush1.msra.mxu0 %v96
  %194 = vmatprep.subr.mxu0 %v105
  %195 = vmatpush1.msra.mxu0 %v104
  %196 = vmatprep.subr.mxu0 %v113
  %197 = vmatpush1.msra.mxu0 %v112
  %198 = vmatprep.subr.mxu0 %v121
  %199 = vmatpush1.msra.mxu0 %v120
  %200 = vmatprep.subr.mxu0 %v129
  %201 = vmatpush1.msra.mxu0 %v128
  %202 = vmatprep.subr.mxu0 %v137
  %203 = vmatpush1.msra.mxu0 %v136
  %204 = vmatprep.subr.mxu0 %v145
  %205 = vmatpush1.msra.mxu0 %v144
  %206 = vmatprep.subr.mxu0 %v153
  %207 = vmatpush1.msra.mxu0 %v152
  %208 = vmatprep.subr.mxu0 %v161
  %209 = vmatpush1.msra.mxu0 %v160
  %210 = vmatprep.subr.mxu0 0.0
  %211 = vmatpush1.msra.mxu0 0.0
  %212 = vmatprep.subr.mxu0 0.0
  %213 = vmatpush1.msra.mxu0 0.0
  %214 = vmatprep.subr.mxu0 0.0
  %215 = vmatpush1.msra.mxu0 0.0
  %216 = vmatprep.subr.mxu0 0.0
  %217 = vmatpush1.msra.mxu0 0.0
  %218 = vmatprep.subr.mxu0 0.0
  %219 = vmatpush1.msra.mxu0 0.0
  %220 = vmatprep.subr.mxu0 0.0
  %221 = vmatpush1.msra.mxu0 0.0
  %222 = vmatprep.subr.mxu0 0.0
  %223 = vmatpush1.msra.mxu0 0.0
  %224 = vmatprep.subr.mxu0 0.0
  %225 = vmatpush1.msra.mxu0 0.0
  %226 = vmatprep.subr.mxu0 0.0
  %227 = vmatpush1.msra.mxu0 0.0
  %228 = vmatprep.subr.mxu0 0.0
  %229 = vmatpush1.msra.mxu0 0.0
  %230 = vmatprep.subr.mxu0 0.0
  %231 = vmatpush1.msra.mxu0 0.0
  %232 = vmatprep.subr.mxu0 0.0
  %233 = vmatpush1.msra.mxu0 0.0
  %234 = vmatprep.subr.mxu0 0.0
  %235 = vmatpush1.msra.mxu0 0.0
  %236 = vmatprep.mubr.f32.mxu0 %v170
  %237 = vmatmul.mubr.f32.gmra.mrb[0].mxu0 %v14
  %v238 = vpop.f32.mrb[0].mxu0
  %v239 = vadd.f32 0.0, %v238
  %v240 = vpop.f32.mrb[0].mxu0
  %v241 = vadd.f32 0.0, %v240
  %242 = vdwg.mxu0
  %243 = vmatprep.subr.mxu0 %v19
  %244 = vmatpush1.msra.mxu0 %v18
  %245 = vmatprep.subr.mxu0 %v27
  %246 = vmatpush1.msra.mxu0 %v26
  %247 = vmatprep.subr.mxu0 %v35
  %248 = vmatpush1.msra.mxu0 %v34
  %249 = vmatprep.subr.mxu0 %v43
  %250 = vmatpush1.msra.mxu0 %v42
  %251 = vmatprep.subr.mxu0 %v51
  %252 = vmatpush1.msra.mxu0 %v50
  %253 = vmatprep.subr.mxu0 %v59
  %254 = vmatpush1.msra.mxu0 %v58
  %255 = vmatprep.subr.mxu0 %v67
  %256 = vmatpush1.msra.mxu0 %v66
  %257 = vmatprep.subr.mxu0 %v75
  %258 = vmatpush1.msra.mxu0 %v74
  %259 = vmatprep.subr.mxu0 %v83
  %260 = vmatpush1.msra.mxu0 %v82
  %261 = vmatprep.subr.mxu0 %v91
  %262 = vmatpush1.msra.mxu0 %v90
  %263 = vmatprep.subr.mxu0 %v99
  %264 = vmatpush1.msra.mxu0 %v98
  %265 = vmatprep.subr.mxu0 %v107
  %266 = vmatpush1.msra.mxu0 %v106
  %267 = vmatprep.subr.mxu0 %v115
  %268 = vmatpush1.msra.mxu0 %v114
  %269 = vmatprep.subr.mxu0 %v123
  %270 = vmatpush1.msra.mxu0 %v122
  %271 = vmatprep.subr.mxu0 %v131
  %272 = vmatpush1.msra.mxu0 %v130
  %273 = vmatprep.subr.mxu0 %v139
  %274 = vmatpush1.msra.mxu0 %v138
  %275 = vmatprep.subr.mxu0 %v147
  %276 = vmatpush1.msra.mxu0 %v146
  %277 = vmatprep.subr.mxu0 %v155
  %278 = vmatpush1.msra.mxu0 %v154
  %279 = vmatprep.subr.mxu0 %v163
  %280 = vmatpush1.msra.mxu0 %v162
  %281 = vmatprep.subr.mxu0 0.0
  %282 = vmatpush1.msra.mxu0 0.0
  %283 = vmatprep.subr.mxu0 0.0
  %284 = vmatpush1.msra.mxu0 0.0
  %285 = vmatprep.subr.mxu0 0.0
  %286 = vmatpush1.msra.mxu0 0.0
  %287 = vmatprep.subr.mxu0 0.0
  %288 = vmatpush1.msra.mxu0 0.0
  %289 = vmatprep.subr.mxu0 0.0
  %290 = vmatpush1.msra.mxu0 0.0
  %291 = vmatprep.subr.mxu0 0.0
  %292 = vmatpush1.msra.mxu0 0.0
  %293 = vmatprep.subr.mxu0 0.0
  %294 = vmatpush1.msra.mxu0 0.0
  %295 = vmatprep.subr.mxu0 0.0
  %296 = vmatpush1.msra.mxu0 0.0
  %297 = vmatprep.subr.mxu0 0.0
  %298 = vmatpush1.msra.mxu0 0.0
  %299 = vmatprep.subr.mxu0 0.0
  %300 = vmatpush1.msra.mxu0 0.0
  %301 = vmatprep.subr.mxu0 0.0
  %302 = vmatpush1.msra.mxu0 0.0
  %303 = vmatprep.subr.mxu0 0.0
  %304 = vmatpush1.msra.mxu0 0.0
  %305 = vmatprep.subr.mxu0 0.0
  %306 = vmatpush1.msra.mxu0 0.0
  %307 = vmatprep.mubr.f32.mxu0 %v170
  %308 = vmatmul.mubr.f32.gmra.mrb[0].mxu0 %v14
  %v309 = vpop.f32.mrb[0].mxu0
  %v310 = vadd.f32 0.0, %v309
  %v311 = vpop.f32.mrb[0].mxu0
  %v312 = vadd.f32 0.0, %v311
  %313 = vdwg.mxu0
  %314 = vmatprep.subr.mxu0 %v21
  %315 = vmatpush1.msra.mxu0 %v20
  %316 = vmatprep.subr.mxu0 %v29
  %317 = vmatpush1.msra.mxu0 %v28
  %318 = vmatprep.subr.mxu0 %v37
  %319 = vmatpush1.msra.mxu0 %v36
  %320 = vmatprep.subr.mxu0 %v45
  %321 = vmatpush1.msra.mxu0 %v44
  %322 = vmatprep.subr.mxu0 %v53
  %323 = vmatpush1.msra.mxu0 %v52
  %324 = vmatprep.subr.mxu0 %v61
  %325 = vmatpush1.msra.mxu0 %v60
  %326 = vmatprep.subr.mxu0 %v69
  %327 = vmatpush1.msra.mxu0 %v68
  %328 = vmatprep.subr.mxu0 %v77
  %329 = vmatpush1.msra.mxu0 %v76
  %330 = vmatprep.subr.mxu0 %v85
  %331 = vmatpush1.msra.mxu0 %v84
  %332 = vmatprep.subr.mxu0 %v93
  %333 = vmatpush1.msra.mxu0 %v92
  %334 = vmatprep.subr.mxu0 %v101
  %335 = vmatpush1.msra.mxu0 %v100
  %336 = vmatprep.subr.mxu0 %v109
  %337 = vmatpush1.msra.mxu0 %v108
  %338 = vmatprep.subr.mxu0 %v117
  %339 = vmatpush1.msra.mxu0 %v116
  %340 = vmatprep.subr.mxu0 %v125
  %341 = vmatpush1.msra.mxu0 %v124
  %342 = vmatprep.subr.mxu0 %v133
  %343 = vmatpush1.msra.mxu0 %v132
  %344 = vmatprep.subr.mxu0 %v141
  %345 = vmatpush1.msra.mxu0 %v140
  %346 = vmatprep.subr.mxu0 %v149
  %347 = vmatpush1.msra.mxu0 %v148
  %348 = vmatprep.subr.mxu0 %v157
  %349 = vmatpush1.msra.mxu0 %v156
  %350 = vmatprep.subr.mxu0 %v165
  %351 = vmatpush1.msra.mxu0 %v164
  %352 = vmatprep.subr.mxu0 0.0
  %353 = vmatpush1.msra.mxu0 0.0
  %354 = vmatprep.subr.mxu0 0.0
  %355 = vmatpush1.msra.mxu0 0.0
  %356 = vmatprep.subr.mxu0 0.0
  %357 = vmatpush1.msra.mxu0 0.0
  %358 = vmatprep.subr.mxu0 0.0
  %359 = vmatpush1.msra.mxu0 0.0
  %360 = vmatprep.subr.mxu0 0.0
  %361 = vmatpush1.msra.mxu0 0.0
  %362 = vmatprep.subr.mxu0 0.0
  %363 = vmatpush1.msra.mxu0 0.0
  %364 = vmatprep.subr.mxu0 0.0
  %365 = vmatpush1.msra.mxu0 0.0
  %366 = vmatprep.subr.mxu0 0.0
  %367 = vmatpush1.msra.mxu0 0.0
  %368 = vmatprep.subr.mxu0 0.0
  %369 = vmatpush1.msra.mxu0 0.0
  %370 = vmatprep.subr.mxu0 0.0
  %371 = vmatpush1.msra.mxu0 0.0
  %372 = vmatprep.subr.mxu0 0.0
  %373 = vmatpush1.msra.mxu0 0.0
  %374 = vmatprep.subr.mxu0 0.0
  %375 = vmatpush1.msra.mxu0 0.0
  %376 = vmatprep.subr.mxu0 0.0
  %377 = vmatpush1.msra.mxu0 0.0
  %378 = vmatprep.mubr.f32.mxu0 %v170
  %379 = vmatmul.mubr.f32.gmra.mrb[0].mxu0 %v14
  %v380 = vpop.f32.mrb[0].mxu0
  %v381 = vadd.f32 0.0, %v380
  %v382 = vpop.f32.mrb[0].mxu0
  %v383 = vadd.f32 0.0, %v382
  %384 = vdwg.mxu0
  %385 = vmatprep.subr.mxu0 %v23
  %386 = vmatpush1.msra.mxu0 %v22
  %387 = vmatprep.subr.mxu0 %v31
  %388 = vmatpush1.msra.mxu0 %v30
  %389 = vmatprep.subr.mxu0 %v39
  %390 = vmatpush1.msra.mxu0 %v38
  %391 = vmatprep.subr.mxu0 %v47
  %392 = vmatpush1.msra.mxu0 %v46
  %393 = vmatprep.subr.mxu0 %v55
  %394 = vmatpush1.msra.mxu0 %v54
  %395 = vmatprep.subr.mxu0 %v63
  %396 = vmatpush1.msra.mxu0 %v62
  %397 = vmatprep.subr.mxu0 %v71
  %398 = vmatpush1.msra.mxu0 %v70
  %399 = vmatprep.subr.mxu0 %v79
  %400 = vmatpush1.msra.mxu0 %v78
  %401 = vmatprep.subr.mxu0 %v87
  %402 = vmatpush1.msra.mxu0 %v86
  %403 = vmatprep.subr.mxu0 %v95
  %404 = vmatpush1.msra.mxu0 %v94
  %405 = vmatprep.subr.mxu0 %v103
  %406 = vmatpush1.msra.mxu0 %v102
  %407 = vmatprep.subr.mxu0 %v111
  %408 = vmatpush1.msra.mxu0 %v110
  %409 = vmatprep.subr.mxu0 %v119
  %410 = vmatpush1.msra.mxu0 %v118
  %411 = vmatprep.subr.mxu0 %v127
  %412 = vmatpush1.msra.mxu0 %v126
  %413 = vmatprep.subr.mxu0 %v135
  %414 = vmatpush1.msra.mxu0 %v134
  %415 = vmatprep.subr.mxu0 %v143
  %416 = vmatpush1.msra.mxu0 %v142
  %417 = vmatprep.subr.mxu0 %v151
  %418 = vmatpush1.msra.mxu0 %v150
  %419 = vmatprep.subr.mxu0 %v159
  %420 = vmatpush1.msra.mxu0 %v158
  %421 = vmatprep.subr.mxu0 %v167
  %422 = vmatpush1.msra.mxu0 %v166
  %423 = vmatprep.subr.mxu0 0.0
  %424 = vmatpush1.msra.mxu0 0.0
  %425 = vmatprep.subr.mxu0 0.0
  %426 = vmatpush1.msra.mxu0 0.0
  %427 = vmatprep.subr.mxu0 0.0
  %428 = vmatpush1.msra.mxu0 0.0
  %429 = vmatprep.subr.mxu0 0.0
  %430 = vmatpush1.msra.mxu0 0.0
  %431 = vmatprep.subr.mxu0 0.0
  %432 = vmatpush1.msra.mxu0 0.0
  %433 = vmatprep.subr.mxu0 0.0
  %434 = vmatpush1.msra.mxu0 0.0
  %435 = vmatprep.subr.mxu0 0.0
  %436 = vmatpush1.msra.mxu0 0.0
  %437 = vmatprep.subr.mxu0 0.0
  %438 = vmatpush1.msra.mxu0 0.0
  %439 = vmatprep.subr.mxu0 0.0
  %440 = vmatpush1.msra.mxu0 0.0
  %441 = vmatprep.subr.mxu0 0.0
  %442 = vmatpush1.msra.mxu0 0.0
  %443 = vmatprep.subr.mxu0 0.0
  %444 = vmatpush1.msra.mxu0 0.0
  %445 = vmatprep.subr.mxu0 0.0
  %446 = vmatpush1.msra.mxu0 0.0
  %447 = vmatprep.subr.mxu0 0.0
  %448 = vmatpush1.msra.mxu0 0.0
  %449 = vmatprep.mubr.f32.mxu0 %v170
  %450 = vmatmul.mubr.f32.gmra.mrb[0].mxu0 %v14
  %v451 = vpop.f32.mrb[0].mxu0
  %v452 = vadd.f32 0.0, %v451
  %v453 = vpop.f32.mrb[0].mxu0
  %v454 = vadd.f32 0.0, %v453
  %455 = vdwg.mxu0
  %v456 = vmax.f32 %v239, %v310
  %v457 = vmax.f32 %v241, %v312
  %v458 = vmax.f32 %v381, %v452
  %v459 = vmax.f32 %v383, %v454
  %v460 = vmax.f32 %v456, %v458
  %v461 = vmax.f32 %v457, %v459
  %v462 = vld [vmem:[%s2] sm:$0xff]
  %464 = vset.pattern.permute.xlu0 0
  %465 = vperm.xlu0 %464, %v462
  %v466 = vpop.permute.xlu0 %465
  %v468 = vadd.f32 %v460, %v466
  %v469 = vadd.f32 %v461, %v466
  %v470 = vmax.f32 %v468, 0.0
  %v471 = vmax.f32 %v469, 0.0
  %472 = vst [vmem:[%s3] sm:$0xff] %v470
  %473 = vst [vmem:[%s3 + $0x8] sm:$0xff] %v471
  // Predicated region
  $region14: #{stn_forward.3} parent=0 // pred_check
    _
  $region15: #{stn_forward.3} parent=0 // pred_check_branch
    %475 = sbr.rel (0) target = $region17
  $region16: #{stn_forward.3} parent=0 // pred_region
    _
  $region17: #{stn_forward.3} parent=0 // pred_fallthru
    _
  // Predicated region
  $region18: #{stn_forward.3} parent=0 // pred_check
    _
  $region19: #{stn_forward.3} parent=0 // pred_check_branch
    %477 = sbr.rel (0) target = $region21
  $region20: #{stn_forward.3} parent=0 // pred_region
    _
  $region21: #{stn_forward.3} parent=0 // pred_fallthru
    _

// kernel: stn_forward.4
$region0: #{stn_forward.4}
  #allocation0 [shape = 'u32[]', space=smem, size = 0x4, offset = 0x4, fixed_abs, tag = 'smem constant byte address 0x4 - core index']
  #allocation1 [shape = 'u32[144,128]{1,0:T(1,128)}', space=vmem, size = 0x12000, scoped, tag = 'internal scratch']
  %s0 = inlined_call_operand.vmem [shape: f32[200,512], index: 0, kind: input, shape index: {}]
  %s1 = inlined_call_operand.vmem [shape: f32[10,200], index: 1, kind: input, shape index: {}]
  %s2 = inlined_call_operand.vmem [shape: f32[10,1], index: 2, kind: input, shape index: {}]
  %s3 = inlined_call_operand.vmem [shape: f32[10,128], index: 3, kind: output, shape index: {}]
  %s4 = sld [smem:[#allocation0]]
  $region22: #{stn_forward.4} parent=0
    _
  %s6 = ssub.s32 1, %s4
  %s7 = scalar_select 0, %s6, %s4
  // Predicated region
  $region2: #{stn_forward.4} parent=0 // pred_check
    _
  $region3: #{stn_forward.4} parent=0 // pred_check_branch
    %9 = sbr.rel (0) target = $region5
  $region4: #{stn_forward.4} parent=0 // pred_region
    _
  $region5: #{stn_forward.4} parent=0 // pred_fallthru
    _
  // Predicated region
  $region6: #{stn_forward.4} parent=0 // pred_check
    _
  $region7: #{stn_forward.4} parent=0 // pred_check_branch
    %11 = sbr.rel (0) target = $region9
  $region8: #{stn_forward.4} parent=0 // pred_region
    _
  $region9: #{stn_forward.4} parent=0 // pred_fallthru
    _
  // Predicated region
  $region10: #{stn_forward.4} parent=0 // pred_check
    _
  $region11: #{stn_forward.4} parent=0 // pred_check_branch
    %13 = sbr.rel (0) target = $region13
  $region12: #{stn_forward.4} parent=0 // pred_region
    _
  $region13: #{stn_forward.4} parent=0 // pred_fallthru
    _
  %v14 = vld [vmem:[%s1] sm:$0xff]
  %v15 = vld [vmem:[%s1 + $0x8] sm:$0xff]
  %v16 = vld [vmem:[%s1 + $0x10] sm:$0x3]
  %v17 = vld [vmem:[%s1 + $0x18] sm:$0x3]
  %v18 = vld [vmem:[%s0] sm:$0xff]
  %v19 = vld [vmem:[%s0 + $0x8] sm:$0xff]
  %v20 = vld [vmem:[%s0 + $0x10] sm:$0xff]
  %v21 = vld [vmem:[%s0 + $0x18] sm:$0xff]
  %v22 = vld [vmem:[%s0 + $0x20] sm:$0xff]
  %v23 = vld [vmem:[%s0 + $0x28] sm:$0xff]
  %v24 = vld [vmem:[%s0 + $0x30] sm:$0xff]
  %v25 = vld [vmem:[%s0 + $0x38] sm:$0xff]
  %v26 = vld [vmem:[%s0 + $0x40] sm:$0xff]
  %v27 = vld [vmem:[%s0 + $0x48] sm:$0xff]
  %v28 = vld [vmem:[%s0 + $0x50] sm:$0xff]
  %v29 = vld [vmem:[%s0 + $0x58] sm:$0xff]
  %v30 = vld [vmem:[%s0 + $0x60] sm:$0xff]
  %v31 = vld [vmem:[%s0 + $0x68] sm:$0xff]
  %v32 = vld [vmem:[%s0 + $0x70] sm:$0xff]
  %v33 = vld [vmem:[%s0 + $0x78] sm:$0xff]
  %v34 = vld [vmem:[%s0 + $0x80] sm:$0xff]
  %v35 = vld [vmem:[%s0 + $0x88] sm:$0xff]
  %v36 = vld [vmem:[%s0 + $0x90] sm:$0xff]
  %v37 = vld [vmem:[%s0 + $0x98] sm:$0xff]
  %v38 = vld [vmem:[%s0 + $0xa0] sm:$0xff]
  %v39 = vld [vmem:[%s0 + $0xa8] sm:$0xff]
  %v40 = vld [vmem:[%s0 + $0xb0] sm:$0xff]
  %v41 = vld [vmem:[%s0 + $0xb8] sm:$0xff]
  %v42 = vld [vmem:[%s0 + $0xc0] sm:$0xff]
  %v43 = vld [vmem:[%s0 + $0xc8] sm:$0xff]
  %v44 = vld [vmem:[%s0 + $0xd0] sm:$0xff]
  %v45 = vld [vmem:[%s0 + $0xd8] sm:$0xff]
  %v46 = vld [vmem:[%s0 + $0xe0] sm:$0xff]
  %v47 = vld [vmem:[%s0 + $0xe8] sm:$0xff]
  %v48 = vld [vmem:[%s0 + $0xf0] sm:$0xff]
  %v49 = vld [vmem:[%s0 + $0xf8] sm:$0xff]
  %v50 = vld [vmem:[%s0 + $0x100] sm:$0xff]
  %v51 = vld [vmem:[%s0 + $0x108] sm:$0xff]
  %v52 = vld [vmem:[%s0 + $0x110] sm:$0xff]
  %v53 = vld [vmem:[%s0 + $0x118] sm:$0xff]
  %v54 = vld [vmem:[%s0 + $0x120] sm:$0xff]
  %v55 = vld [vmem:[%s0 + $0x128] sm:$0xff]
  %v56 = vld [vmem:[%s0 + $0x130] sm:$0xff]
  %v57 = vld [vmem:[%s0 + $0x138] sm:$0xff]
  %v58 = vld [vmem:[%s0 + $0x140] sm:$0xff]
  %v59 = vld [vmem:[%s0 + $0x148] sm:$0xff]
  %v60 = vld [vmem:[%s0 + $0x150] sm:$0xff]
  %v61 = vld [vmem:[%s0 + $0x158] sm:$0xff]
  %v62 = vld [vmem:[%s0 + $0x160] sm:$0xff]
  %v63 = vld [vmem:[%s0 + $0x168] sm:$0xff]
  %v64 = vld [vmem:[%s0 + $0x170] sm:$0xff]
  %v65 = vld [vmem:[%s0 + $0x178] sm:$0xff]
  %v66 = vld [vmem:[%s0 + $0x180] sm:$0xff]
  %v67 = vld [vmem:[%s0 + $0x188] sm:$0xff]
  %v68 = vld [vmem:[%s0 + $0x190] sm:$0xff]
  %v69 = vld [vmem:[%s0 + $0x198] sm:$0xff]
  %v70 = vld [vmem:[%s0 + $0x1a0] sm:$0xff]
  %v71 = vld [vmem:[%s0 + $0x1a8] sm:$0xff]
  %v72 = vld [vmem:[%s0 + $0x1b0] sm:$0xff]
  %v73 = vld [vmem:[%s0 + $0x1b8] sm:$0xff]
  %v74 = vld [vmem:[%s0 + $0x1c0] sm:$0xff]
  %v75 = vld [vmem:[%s0 + $0x1c8] sm:$0xff]
  %v76 = vld [vmem:[%s0 + $0x1d0] sm:$0xff]
  %v77 = vld [vmem:[%s0 + $0x1d8] sm:$0xff]
  %v78 = vld [vmem:[%s0 + $0x1e0] sm:$0xff]
  %v79 = vld [vmem:[%s0 + $0x1e8] sm:$0xff]
  %v80 = vld [vmem:[%s0 + $0x1f0] sm:$0xff]
  %v81 = vld [vmem:[%s0 + $0x1f8] sm:$0xff]
  %v82 = vld [vmem:[%s0 + $0x200] sm:$0xff]
  %v83 = vld [vmem:[%s0 + $0x208] sm:$0xff]
  %v84 = vld [vmem:[%s0 + $0x210] sm:$0xff]
  %v85 = vld [vmem:[%s0 + $0x218] sm:$0xff]
  %v86 = vld [vmem:[%s0 + $0x220] sm:$0xff]
  %v87 = vld [vmem:[%s0 + $0x228] sm:$0xff]
  %v88 = vld [vmem:[%s0 + $0x230] sm:$0xff]
  %v89 = vld [vmem:[%s0 + $0x238] sm:$0xff]
  %v90 = vld [vmem:[%s0 + $0x240] sm:$0xff]
  %v91 = vld [vmem:[%s0 + $0x248] sm:$0xff]
  %v92 = vld [vmem:[%s0 + $0x250] sm:$0xff]
  %v93 = vld [vmem:[%s0 + $0x258] sm:$0xff]
  %v94 = vld [vmem:[%s0 + $0x260] sm:$0xff]
  %v95 = vld [vmem:[%s0 + $0x268] sm:$0xff]
  %v96 = vld [vmem:[%s0 + $0x270] sm:$0xff]
  %v97 = vld [vmem:[%s0 + $0x278] sm:$0xff]
  %v98 = vld [vmem:[%s0 + $0x280] sm:$0xff]
  %v99 = vld [vmem:[%s0 + $0x288] sm:$0xff]
  %v100 = vld [vmem:[%s0 + $0x290] sm:$0xff]
  %v101 = vld [vmem:[%s0 + $0x298] sm:$0xff]
  %v102 = vld [vmem:[%s0 + $0x2a0] sm:$0xff]
  %v103 = vld [vmem:[%s0 + $0x2a8] sm:$0xff]
  %v104 = vld [vmem:[%s0 + $0x2b0] sm:$0xff]
  %v105 = vld [vmem:[%s0 + $0x2b8] sm:$0xff]
  %v106 = vld [vmem:[%s0 + $0x2c0] sm:$0xff]
  %v107 = vld [vmem:[%s0 + $0x2c8] sm:$0xff]
  %v108 = vld [vmem:[%s0 + $0x2d0] sm:$0xff]
  %v109 = vld [vmem:[%s0 + $0x2d8] sm:$0xff]
  %v110 = vld [vmem:[%s0 + $0x2e0] sm:$0xff]
  %v111 = vld [vmem:[%s0 + $0x2e8] sm:$0xff]
  %v112 = vld [vmem:[%s0 + $0x2f0] sm:$0xff]
  %v113 = vld [vmem:[%s0 + $0x2f8] sm:$0xff]
  %v114 = vld [vmem:[%s0 + $0x300] sm:$0xff]
  %v115 = vld [vmem:[%s0 + $0x308] sm:$0xff]
  %v116 = vld [vmem:[%s0 + $0x310] sm:$0xff]
  %v117 = vld [vmem:[%s0 + $0x318] sm:$0xff]
  %vm118 = vcmask 588800
  %v120 = vsel %vm118, %v15, 0
  %v123 = vsel %vm118, %v17, 0
  %125 = vmatprep.subr.mxu0 %v19
  %126 = vmatpush1.msra.mxu0 %v18
  %127 = vmatprep.subr.mxu0 %v23
  %128 = vmatpush1.msra.mxu0 %v22
  %129 = vmatprep.subr.mxu0 %v27
  %130 = vmatpush1.msra.mxu0 %v26
  %131 = vmatprep.subr.mxu0 %v31
  %132 = vmatpush1.msra.mxu0 %v30
  %133 = vmatprep.subr.mxu0 %v35
  %134 = vmatpush1.msra.mxu0 %v34
  %135 = vmatprep.subr.mxu0 %v39
  %136 = vmatpush1.msra.mxu0 %v38
  %137 = vmatprep.subr.mxu0 %v43
  %138 = vmatpush1.msra.mxu0 %v42
  %139 = vmatprep.subr.mxu0 %v47
  %140 = vmatpush1.msra.mxu0 %v46
  %141 = vmatprep.subr.mxu0 %v51
  %142 = vmatpush1.msra.mxu0 %v50
  %143 = vmatprep.subr.mxu0 %v55
  %144 = vmatpush1.msra.mxu0 %v54
  %145 = vmatprep.subr.mxu0 %v59
  %146 = vmatpush1.msra.mxu0 %v58
  %147 = vmatprep.subr.mxu0 %v63
  %148 = vmatpush1.msra.mxu0 %v62
  %149 = vmatprep.subr.mxu0 %v67
  %150 = vmatpush1.msra.mxu0 %v66
  %151 = vmatprep.subr.mxu0 %v71
  %152 = vmatpush1.msra.mxu0 %v70
  %153 = vmatprep.subr.mxu0 %v75
  %154 = vmatpush1.msra.mxu0 %v74
  %155 = vmatprep.subr.mxu0 %v79
  %156 = vmatpush1.msra.mxu0 %v78
  %157 = vmatprep.subr.mxu0 %v83
  %158 = vmatpush1.msra.mxu0 %v82
  %159 = vmatprep.subr.mxu0 %v87
  %160 = vmatpush1.msra.mxu0 %v86
  %161 = vmatprep.subr.mxu0 %v91
  %162 = vmatpush1.msra.mxu0 %v90
  %163 = vmatprep.subr.mxu0 %v95
  %164 = vmatpush1.msra.mxu0 %v94
  %165 = vmatprep.subr.mxu0 %v99
  %166 = vmatpush1.msra.mxu0 %v98
  %167 = vmatprep.subr.mxu0 %v103
  %168 = vmatpush1.msra.mxu0 %v102
  %169 = vmatprep.subr.mxu0 %v107
  %170 = vmatpush1.msra.mxu0 %v106
  %171 = vmatprep.subr.mxu0 %v111
  %172 = vmatpush1.msra.mxu0 %v110
  %173 = vmatprep.subr.mxu0 %v115
  %174 = vmatpush1.msra.mxu0 %v114
  %175 = vmatprep.subr.mxu0 0.0
  %176 = vmatpush1.msra.mxu0 0.0
  %177 = vmatprep.subr.mxu0 0.0
  %178 = vmatpush1.msra.mxu0 0.0
  %179 = vmatprep.subr.mxu0 0.0
  %180 = vmatpush1.msra.mxu0 0.0
  %181 = vmatprep.subr.mxu0 0.0
  %182 = vmatpush1.msra.mxu0 0.0
  %183 = vmatprep.subr.mxu0 0.0
  %184 = vmatpush1.msra.mxu0 0.0
  %185 = vmatprep.subr.mxu0 0.0
  %186 = vmatpush1.msra.mxu0 0.0
  %187 = vmatprep.subr.mxu0 0.0
  %188 = vmatpush1.msra.mxu0 0.0
  %189 = vmatprep.mubr.f32.mxu0 %v120
  %190 = vmatmul.mubr.f32.gmra.mrb[0].mxu0 %v14
  %v191 = vpop.f32.mrb[0].mxu0
  %v192 = vadd.f32 0.0, %v191
  %v193 = vpop.f32.mrb[0].mxu0
  %v194 = vadd.f32 0.0, %v193
  %195 = vmatprep.mubr.f32.mxu0 %v123
  %196 = vmatmul.mubr.f32.gmra.mrb[0].mxu0 %v16
  %v197 = vpop.f32.mrb[0].mxu0
  %v198 = vadd.f32 0.0, %v197
  %v199 = vpop.f32.mrb[0].mxu0
  %v200 = vadd.f32 0.0, %v199
  %201 = vdwg.mxu0
  %202 = vmatprep.subr.mxu0 %v21
  %203 = vmatpush1.msra.mxu0 %v20
  %204 = vmatprep.subr.mxu0 %v25
  %205 = vmatpush1.msra.mxu0 %v24
  %206 = vmatprep.subr.mxu0 %v29
  %207 = vmatpush1.msra.mxu0 %v28
  %208 = vmatprep.subr.mxu0 %v33
  %209 = vmatpush1.msra.mxu0 %v32
  %210 = vmatprep.subr.mxu0 %v37
  %211 = vmatpush1.msra.mxu0 %v36
  %212 = vmatprep.subr.mxu0 %v41
  %213 = vmatpush1.msra.mxu0 %v40
  %214 = vmatprep.subr.mxu0 %v45
  %215 = vmatpush1.msra.mxu0 %v44
  %216 = vmatprep.subr.mxu0 %v49
  %217 = vmatpush1.msra.mxu0 %v48
  %218 = vmatprep.subr.mxu0 %v53
  %219 = vmatpush1.msra.mxu0 %v52
  %220 = vmatprep.subr.mxu0 %v57
  %221 = vmatpush1.msra.mxu0 %v56
  %222 = vmatprep.subr.mxu0 %v61
  %223 = vmatpush1.msra.mxu0 %v60
  %224 = vmatprep.subr.mxu0 %v65
  %225 = vmatpush1.msra.mxu0 %v64
  %226 = vmatprep.subr.mxu0 %v69
  %227 = vmatpush1.msra.mxu0 %v68
  %228 = vmatprep.subr.mxu0 %v73
  %229 = vmatpush1.msra.mxu0 %v72
  %230 = vmatprep.subr.mxu0 %v77
  %231 = vmatpush1.msra.mxu0 %v76
  %232 = vmatprep.subr.mxu0 %v81
  %233 = vmatpush1.msra.mxu0 %v80
  %234 = vmatprep.subr.mxu0 %v85
  %235 = vmatpush1.msra.mxu0 %v84
  %236 = vmatprep.subr.mxu0 %v89
  %237 = vmatpush1.msra.mxu0 %v88
  %238 = vmatprep.subr.mxu0 %v93
  %239 = vmatpush1.msra.mxu0 %v92
  %240 = vmatprep.subr.mxu0 %v97
  %241 = vmatpush1.msra.mxu0 %v96
  %242 = vmatprep.subr.mxu0 %v101
  %243 = vmatpush1.msra.mxu0 %v100
  %244 = vmatprep.subr.mxu0 %v105
  %245 = vmatpush1.msra.mxu0 %v104
  %246 = vmatprep.subr.mxu0 %v109
  %247 = vmatpush1.msra.mxu0 %v108
  %248 = vmatprep.subr.mxu0 %v113
  %249 = vmatpush1.msra.mxu0 %v112
  %250 = vmatprep.subr.mxu0 %v117
  %251 = vmatpush1.msra.mxu0 %v116
  %252 = vmatprep.subr.mxu0 0.0
  %253 = vmatpush1.msra.mxu0 0.0
  %254 = vmatprep.subr.mxu0 0.0
  %255 = vmatpush1.msra.mxu0 0.0
  %256 = vmatprep.subr.mxu0 0.0
  %257 = vmatpush1.msra.mxu0 0.0
  %258 = vmatprep.subr.mxu0 0.0
  %259 = vmatpush1.msra.mxu0 0.0
  %260 = vmatprep.subr.mxu0 0.0
  %261 = vmatpush1.msra.mxu0 0.0
  %262 = vmatprep.subr.mxu0 0.0
  %263 = vmatpush1.msra.mxu0 0.0
  %264 = vmatprep.subr.mxu0 0.0
  %265 = vmatpush1.msra.mxu0 0.0
  %266 = vmatprep.mubr.f32.mxu0 %v120
  %267 = vmatmul.mubr.f32.gmra.mrb[0].mxu0 %v14
  %v268 = vpop.f32.mrb[0].mxu0
  %v269 = vadd.f32 0.0, %v268
  %v270 = vpop.f32.mrb[0].mxu0
  %v271 = vadd.f32 0.0, %v270
  %272 = vmatprep.mubr.f32.mxu0 %v123
  %273 = vmatmul.mubr.f32.gmra.mrb[0].mxu0 %v16
  %v274 = vpop.f32.mrb[0].mxu0
  %v275 = vadd.f32 0.0, %v274
  %v276 = vpop.f32.mrb[0].mxu0
  %v277 = vadd.f32 0.0, %v276
  %278 = vdwg.mxu0
  %v279 = vmax.f32 %v192, %v194
  %v280 = vmax.f32 %v198, %v200
  %v281 = vmax.f32 %v269, %v271
  %v282 = vmax.f32 %v275, %v277
  %v283 = vmax.f32 %v279, %v281
  %v284 = vmax.f32 %v280, %v282
  %v285 = vld [vmem:[%s2] sm:$0xff]
  %v286 = vld [vmem:[%s2 + $0x8] sm:$0x3]
  %288 = vset.pattern.permute.xlu0 0
  %289 = vperm.xlu0 %288, %v285
  %v290 = vpop.permute.xlu0 %289
  %293 = vset.pattern.permute.xlu0 0
  %294 = vperm.xlu0 %293, %v286
  %v295 = vpop.permute.xlu0 %294
  %v297 = vadd.f32 %v283, %v290
  %v298 = vadd.f32 %v284, %v295
  %v299 = vmax.f32 %v297, 0.0
  %v300 = vmax.f32 %v298, 0.0
  %301 = vst [vmem:[%s3] sm:$0xff] %v299
  %302 = vst [vmem:[%s3 + $0x8] sm:$0x3] %v300
  // Predicated region
  $region14: #{stn_forward.4} parent=0 // pred_check
    _
  $region15: #{stn_forward.4} parent=0 // pred_check_branch
    %304 = sbr.rel (0) target = $region17
  $region16: #{stn_forward.4} parent=0 // pred_region
    _
  $region17: #{stn_forward.4} parent=0 // pred_fallthru
    _
  // Predicated region
  $region18: #{stn_forward.4} parent=0 // pred_check
    _
  $region19: #{stn_forward.4} parent=0 // pred_check_branch
    %306 = sbr.rel (0) target = $region21
  $region20: #{stn_forward.4} parent=0 // pred_region
    _
  $region21: #{stn_forward.4} parent=0 // pred_fallthru
    _

// kernel: stn_forward.5
$region0: #{stn_forward.5}
  #allocation0 [shape = 'u32[]', space=smem, size = 0x4, offset = 0x4, fixed_abs, tag = 'smem constant byte address 0x4 - core index']
  #allocation1 [shape = 'u32[144,128]{1,0:T(1,128)}', space=vmem, size = 0x12000, scoped, tag = 'internal scratch']
  #allocation2 [shape = 'f32[1,6]{1,0:T(1,128)}', space=vmem, size = 0x200, scoped, tag = 'scratch operand']
  %s0 = inlined_call_operand.vmem [shape: f32[2,84,28], index: 0, kind: input, shape index: {}]
  %s1 = inlined_call_operand.vmem [shape: f32[2,1,90], index: 1, kind: input, shape index: {}]
  %s2 = inlined_call_operand.vmem [shape: f32[90,32], index: 2, kind: input, shape index: {}]
  %s3 = inlined_call_operand.vmem [shape: f32[1,32], index: 3, kind: input, shape index: {}]
  %s4 = inlined_call_operand.vmem [shape: f32[32,6], index: 4, kind: input, shape index: {}]
  %s5 = inlined_call_operand.vmem [shape: f32[1,6], index: 5, kind: input, shape index: {}]
  %s6 = inlined_call_operand.vmem [shape: f32[1,896], index: 6, kind: input, shape index: {}]
  %s7 = inlined_call_operand.vmem [shape: f32[1,896], index: 7, kind: input, shape index: {}]
  %s8 = inlined_call_operand.vmem [shape: s32[84,1], index: 8, kind: input, shape index: {}]
  %s9 = inlined_call_operand.vmem [shape: f32[3,84], index: 9, kind: input, shape index: {}]
  %s10 = inlined_call_operand.vmem [shape: f32[2,3,896], index: 10, kind: output, shape index: {}]
  %s11 = sld [smem:[#allocation0]]
  $region77: #{stn_forward.5} parent=0
    _
  %s13 = ssub.s32 1, %s11
  %s14 = scalar_select 0, %s13, %s11
  loop: start=0, step=1, limit=16
  $region2: #{stn_forward.5} parent=0 // loop_pre_header
    _
  $region3: #{stn_forward.5} parent=0 // loop_header
    %s16 = sphi 0, %s20
    %p17 = scmp.ge.s32.totalorder %s16, 16
    %s23 = sphi 0, %s35
    %s24 = sphi 0, %s31
    %s25 = sphi 0, %s23
    %s26 = sphi 0, %s24
    %s27 = sphi 0, %s25
    %s28 = sphi 0, %s26
    %s38 = sphi 0, %s40
    %s41 = sphi 0, %s38
    %s42 = sphi 0, %s41
    %s58 = sphi 0, %s42
    %s64 = sphi 0, %s66
    %s67 = sphi 0, %s64
    %s68 = sphi 0, %s67
    %s84 = sphi 0, %s68
    %s88 = sphi 0, %s88
    %s90 = sphi 0, %s88
    %s91 = sphi 0, %s90
    %s105 = sphi 0, %s91
    %s109 = sphi 0, %s109
    %s111 = sphi 0, %s109
    %s112 = sphi 0, %s111
    %s126 = sphi 0, %s112
    %s130 = sphi 0, %s130
    %s132 = sphi 0, %s130
    %s133 = sphi 0, %s132
    %s147 = sphi 0, %s133
    %s151 = sphi 0, %s151
    %s153 = sphi 0, %s151
    %s154 = sphi 0, %s153
    %s168 = sphi 0, %s154
    %s174 = sphi 0, %s176
    %s177 = sphi 0, %s174
    %s178 = sphi 0, %s177
    %s194 = sphi 0, %s178
    %s200 = sphi 0, %s202
    %s203 = sphi 0, %s200
    %s204 = sphi 0, %s203
    %s220 = sphi 0, %s204
    %s224 = sphi 0, %s224
    %s226 = sphi 0, %s224
    %s227 = sphi 0, %s226
    %s241 = sphi 0, %s227
    %s245 = sphi 0, %s245
    %s247 = sphi 0, %s245
    %s248 = sphi 0, %s247
    %s262 = sphi 0, %s248
    %s270 = sphi 0, %s272
    %s273 = sphi 0, %s270
    %s274 = sphi 0, %s273
    %s290 = sphi 0, %s274
  $region4: #{stn_forward.5} parent=0 // loop_header_branch
    %19 = sbr.rel (%p17) target = $region8
  $region5: #{stn_forward.5} parent=0 // loop_body
    %s21 = ssub.s32 %s16, 1
    %s22 = ssub.s32 %s16, 2
    %s29 = sadd.s32 1, %s24
    %p30 = scmp.ge.s32.totalorder %s29, 7
    %s31 = scalar_select %p30, 0, %s29
    %s32 = sadd.s32 1, %s23
    %s33 = scalar_select %p30, %s32, %s23
    %p34 = scmp.ge.s32.totalorder %s33, 2
    %s35 = scalar_select %p34, 0, %s33
    %s36 = ssub.s32 %s23, %s35
    %p37 = scmp.eq.s32.totalorder %s36, 0
    %s39 = sadd.s32 %s38, 1
    %s40 = scalar_select %p37, %s38, %s39
    %p43 = pneg %p37
    %p44 = scmp.eq.s32.totalorder %s16, 13
    %p45 = por %p43, %p44
    %p46 = scmp.ne.s32.totalorder %s38, %s41
    %p47 = scmp.eq.s32.totalorder %s16, 0
    %p48 = por %p46, %p47
    %p49 = scmp.ne.s32.totalorder %s38, %s41
    %p50 = scmp.eq.s32.totalorder %s21, 13
    %p51 = por %p49, %p50
    %p52 = scmp.ne.s32.totalorder %s41, %s42
    %p53 = scmp.eq.s32.totalorder %s21, 0
    %p54 = por %p52, %p53
    %p55 = scmp.ne.s32.totalorder %s41, %s42
    %p56 = scmp.eq.s32.totalorder %s22, 13
    %p57 = por %p55, %p56
    %p59 = scmp.ne.s32.totalorder %s42, %s58
    %p60 = scmp.eq.s32.totalorder %s22, 0
    %p61 = por %p59, %p60
    %s62 = ssub.s32 %s23, %s35
    %p63 = scmp.eq.s32.totalorder %s62, 0
    %s65 = sadd.s32 %s64, 1
    %s66 = scalar_select %p63, %s64, %s65
    %p69 = pneg %p63
    %p70 = scmp.eq.s32.totalorder %s16, 13
    %p71 = por %p69, %p70
    %p72 = scmp.ne.s32.totalorder %s64, %s67
    %p73 = scmp.eq.s32.totalorder %s16, 0
    %p74 = por %p72, %p73
    %p75 = scmp.ne.s32.totalorder %s64, %s67
    %p76 = scmp.eq.s32.totalorder %s21, 13
    %p77 = por %p75, %p76
    %p78 = scmp.ne.s32.totalorder %s67, %s68
    %p79 = scmp.eq.s32.totalorder %s21, 0
    %p80 = por %p78, %p79
    %p81 = scmp.ne.s32.totalorder %s67, %s68
    %p82 = scmp.eq.s32.totalorder %s22, 13
    %p83 = por %p81, %p82
    %p85 = scmp.ne.s32.totalorder %s68, %s84
    %p86 = scmp.eq.s32.totalorder %s22, 0
    %p87 = por %p85, %p86
    %s89 = sadd.s32 %s88, 1
    %p92 = scmp.eq.s32.totalorder %s16, 13
    %p93 = scmp.ne.s32.totalorder %s88, %s90
    %p94 = scmp.eq.s32.totalorder %s16, 0
    %p95 = por %p93, %p94
    %p96 = scmp.ne.s32.totalorder %s88, %s90
    %p97 = scmp.eq.s32.totalorder %s21, 13
    %p98 = por %p96, %p97
    %p99 = scmp.ne.s32.totalorder %s90, %s91
    %p100 = scmp.eq.s32.totalorder %s21, 0
    %p101 = por %p99, %p100
    %p102 = scmp.ne.s32.totalorder %s90, %s91
    %p103 = scmp.eq.s32.totalorder %s22, 13
    %p104 = por %p102, %p103
    %p106 = scmp.ne.s32.totalorder %s91, %s105
    %p107 = scmp.eq.s32.totalorder %s22, 0
    %p108 = por %p106, %p107
    %s110 = sadd.s32 %s109, 1
    %p113 = scmp.eq.s32.totalorder %s16, 13
    %p114 = scmp.ne.s32.totalorder %s109, %s111
    %p115 = scmp.eq.s32.totalorder %s16, 0
    %p116 = por %p114, %p115
    %p117 = scmp.ne.s32.totalorder %s109, %s111
    %p118 = scmp.eq.s32.totalorder %s21, 13
    %p119 = por %p117, %p118
    %p120 = scmp.ne.s32.totalorder %s111, %s112
    %p121 = scmp.eq.s32.totalorder %s21, 0
    %p122 = por %p120, %p121
    %p123 = scmp.ne.s32.totalorder %s111, %s112
    %p124 = scmp.eq.s32.totalorder %s22, 13
    %p125 = por %p123, %p124
    %p127 = scmp.ne.s32.totalorder %s112, %s126
    %p128 = scmp.eq.s32.totalorder %s22, 0
    %p129 = por %p127, %p128
    %s131 = sadd.s32 %s130, 1
    %p134 = scmp.eq.s32.totalorder %s16, 13
    %p135 = scmp.ne.s32.totalorder %s130, %s132
    %p136 = scmp.eq.s32.totalorder %s16, 0
    %p137 = por %p135, %p136
    %p138 = scmp.ne.s32.totalorder %s130, %s132
    %p139 = scmp.eq.s32.totalorder %s21, 13
    %p140 = por %p138, %p139
    %p141 = scmp.ne.s32.totalorder %s132, %s133
    %p142 = scmp.eq.s32.totalorder %s21, 0
    %p143 = por %p141, %p142
    %p144 = scmp.ne.s32.totalorder %s132, %s133
    %p145 = scmp.eq.s32.totalorder %s22, 13
    %p146 = por %p144, %p145
    %p148 = scmp.ne.s32.totalorder %s133, %s147
    %p149 = scmp.eq.s32.totalorder %s22, 0
    %p150 = por %p148, %p149
    %s152 = sadd.s32 %s151, 1
    %p155 = scmp.eq.s32.totalorder %s16, 13
    %p156 = scmp.ne.s32.totalorder %s151, %s153
    %p157 = scmp.eq.s32.totalorder %s16, 0
    %p158 = por %p156, %p157
    %p159 = scmp.ne.s32.totalorder %s151, %s153
    %p160 = scmp.eq.s32.totalorder %s21, 13
    %p161 = por %p159, %p160
    %p162 = scmp.ne.s32.totalorder %s153, %s154
    %p163 = scmp.eq.s32.totalorder %s21, 0
    %p164 = por %p162, %p163
    %p165 = scmp.ne.s32.totalorder %s153, %s154
    %p166 = scmp.eq.s32.totalorder %s22, 13
    %p167 = por %p165, %p166
    %p169 = scmp.ne.s32.totalorder %s154, %s168
    %p170 = scmp.eq.s32.totalorder %s22, 0
    %p171 = por %p169, %p170
    %s172 = ssub.s32 %s24, %s31
    %p173 = scmp.eq.s32.totalorder %s172, 0
    %s175 = sadd.s32 %s174, 1
    %s176 = scalar_select %p173, %s174, %s175
    %p179 = pneg %p173
    %p180 = scmp.eq.s32.totalorder %s16, 13
    %p181 = por %p179, %p180
    %p182 = scmp.ne.s32.totalorder %s174, %s177
    %p183 = scmp.eq.s32.totalorder %s16, 0
    %p184 = por %p182, %p183
    %p185 = scmp.ne.s32.totalorder %s174, %s177
    %p186 = scmp.eq.s32.totalorder %s21, 13
    %p187 = por %p185, %p186
    %p188 = scmp.ne.s32.totalorder %s177, %s178
    %p189 = scmp.eq.s32.totalorder %s21, 0
    %p190 = por %p188, %p189
    %p191 = scmp.ne.s32.totalorder %s177, %s178
    %p192 = scmp.eq.s32.totalorder %s22, 13
    %p193 = por %p191, %p192
    %p195 = scmp.ne.s32.totalorder %s178, %s194
    %p196 = scmp.eq.s32.totalorder %s22, 0
    %p197 = por %p195, %p196
    %s198 = ssub.s32 %s24, %s31
    %p199 = scmp.eq.s32.totalorder %s198, 0
    %s201 = sadd.s32 %s200, 1
    %s202 = scalar_select %p199, %s200, %s201
    %p205 = pneg %p199
    %p206 = scmp.eq.s32.totalorder %s16, 13
    %p207 = por %p205, %p206
    %p208 = scmp.ne.s32.totalorder %s200, %s203
    %p209 = scmp.eq.s32.totalorder %s16, 0
    %p210 = por %p208, %p209
    %p211 = scmp.ne.s32.totalorder %s200, %s203
    %p212 = scmp.eq.s32.totalorder %s21, 13
    %p213 = por %p211, %p212
    %p214 = scmp.ne.s32.totalorder %s203, %s204
    %p215 = scmp.eq.s32.totalorder %s21, 0
    %p216 = por %p214, %p215
    %p217 = scmp.ne.s32.totalorder %s203, %s204
    %p218 = scmp.eq.s32.totalorder %s22, 13
    %p219 = por %p217, %p218
    %p221 = scmp.ne.s32.totalorder %s204, %s220
    %p222 = scmp.eq.s32.totalorder %s22, 0
    %p223 = por %p221, %p222
    %s225 = sadd.s32 %s224, 1
    %p228 = scmp.eq.s32.totalorder %s16, 13
    %p229 = scmp.ne.s32.totalorder %s224, %s226
    %p230 = scmp.eq.s32.totalorder %s16, 0
    %p231 = por %p229, %p230
    %p232 = scmp.ne.s32.totalorder %s224, %s226
    %p233 = scmp.eq.s32.totalorder %s21, 13
    %p234 = por %p232, %p233
    %p235 = scmp.ne.s32.totalorder %s226, %s227
    %p236 = scmp.eq.s32.totalorder %s21, 0
    %p237 = por %p235, %p236
    %p238 = scmp.ne.s32.totalorder %s226, %s227
    %p239 = scmp.eq.s32.totalorder %s22, 13
    %p240 = por %p238, %p239
    %p242 = scmp.ne.s32.totalorder %s227, %s241
    %p243 = scmp.eq.s32.totalorder %s22, 0
    %p244 = por %p242, %p243
    %s246 = sadd.s32 %s245, 1
    %p249 = scmp.eq.s32.totalorder %s16, 13
    %p250 = scmp.ne.s32.totalorder %s245, %s247
    %p251 = scmp.eq.s32.totalorder %s16, 0
    %p252 = por %p250, %p251
    %p253 = scmp.ne.s32.totalorder %s245, %s247
    %p254 = scmp.eq.s32.totalorder %s21, 13
    %p255 = por %p253, %p254
    %p256 = scmp.ne.s32.totalorder %s247, %s248
    %p257 = scmp.eq.s32.totalorder %s21, 0
    %p258 = por %p256, %p257
    %p259 = scmp.ne.s32.totalorder %s247, %s248
    %p260 = scmp.eq.s32.totalorder %s22, 13
    %p261 = por %p259, %p260
    %p263 = scmp.ne.s32.totalorder %s248, %s262
    %p264 = scmp.eq.s32.totalorder %s22, 0
    %p265 = por %p263, %p264
    %s266 = ssub.s32 %s23, %s35
    %s267 = ssub.s32 %s24, %s31
    %s268 = sor.u32 %s266, %s267
    %p269 = scmp.eq.s32.totalorder %s268, 0
    %s271 = sadd.s32 %s270, 1
    %s272 = scalar_select %p269, %s270, %s271
    %p275 = pneg %p269
    %p276 = scmp.eq.s32.totalorder %s16, 13
    %p277 = por %p275, %p276
    %p278 = scmp.ne.s32.totalorder %s270, %s273
    %p279 = scmp.eq.s32.totalorder %s16, 0
    %p280 = por %p278, %p279
    %p281 = scmp.ne.s32.totalorder %s270, %s273
    %p282 = scmp.eq.s32.totalorder %s21, 13
    %p283 = por %p281, %p282
    %p284 = scmp.ne.s32.totalorder %s273, %s274
    %p285 = scmp.eq.s32.totalorder %s21, 0
    %p286 = por %p284, %p285
    %p287 = scmp.ne.s32.totalorder %s273, %s274
    %p288 = scmp.eq.s32.totalorder %s22, 13
    %p289 = por %p287, %p288
    %p291 = scmp.ne.s32.totalorder %s274, %s290
    %p292 = scmp.eq.s32.totalorder %s22, 0
    %p293 = por %p291, %p292
    %p294 = scmp.le.s32.totalorder 1, %s16
    %p295 = scmp.lt.s32.totalorder %s16, 15
    %p296 = pnand %p294, %p295
    %p297 = pneg %p296
    // Predicated region
    $region9: #{stn_forward.5} parent=5 // pred_check
      _
    $region10: #{stn_forward.5} parent=5 // pred_check_branch
      %299 = sbr.rel (%p296) target = $region12
    $region11: #{stn_forward.5} parent=5 // pred_region
      %s300 = ssub.s32 %s16, 1
      // Predicated region
      $region13: #{stn_forward.5} parent=11 // pred_check
        %p301 = pneg %p101
      $region14: #{stn_forward.5} parent=11 // pred_check_branch
        %303 = sbr.rel (%p301) target = $region16
      $region15: #{stn_forward.5} parent=11 // pred_region
        _
      $region16: #{stn_forward.5} parent=11 // pred_fallthru
        _
      // Predicated region
      $region17: #{stn_forward.5} parent=11 // pred_check
        %p304 = pneg %p122
      $region18: #{stn_forward.5} parent=11 // pred_check_branch
        %306 = sbr.rel (%p304) target = $region20
      $region19: #{stn_forward.5} parent=11 // pred_region
        _
      $region20: #{stn_forward.5} parent=11 // pred_fallthru
        _
      // Predicated region
      $region21: #{stn_forward.5} parent=11 // pred_check
        %p307 = pneg %p143
      $region22: #{stn_forward.5} parent=11 // pred_check_branch
        %309 = sbr.rel (%p307) target = $region24
      $region23: #{stn_forward.5} parent=11 // pred_region
        _
      $region24: #{stn_forward.5} parent=11 // pred_fallthru
        _
      // Predicated region
      $region25: #{stn_forward.5} parent=11 // pred_check
        %p310 = pneg %p164
      $region26: #{stn_forward.5} parent=11 // pred_check_branch
        %312 = sbr.rel (%p310) target = $region28
      $region27: #{stn_forward.5} parent=11 // pred_region
        _
      $region28: #{stn_forward.5} parent=11 // pred_fallthru
        _
      // Predicated region
      $region29: #{stn_forward.5} parent=11 // pred_check
        %p313 = pneg %p237
      $region30: #{stn_forward.5} parent=11 // pred_check_branch
        %315 = sbr.rel (%p313) target = $region32
      $region31: #{stn_forward.5} parent=11 // pred_region
        _
      $region32: #{stn_forward.5} parent=11 // pred_fallthru
        _
      // Predicated region
      $region33: #{stn_forward.5} parent=11 // pred_check
        %p316 = pneg %p258
      $region34: #{stn_forward.5} parent=11 // pred_check_branch
        %318 = sbr.rel (%p316) target = $region36
      $region35: #{stn_forward.5} parent=11 // pred_region
        _
      $region36: #{stn_forward.5} parent=11 // pred_fallthru
        _
    $region12: #{stn_forward.5} parent=5 // pred_fallthru
      _
    %p319 = scmp.lt.s32.totalorder %s16, 14
    // Predicated region
    $region37: #{stn_forward.5} parent=5 // pred_check
      %p320 = pneg %p319
    $region38: #{stn_forward.5} parent=5 // pred_check_branch
      %322 = sbr.rel (%p320) target = $region40
    $region39: #{stn_forward.5} parent=5 // pred_region
      // Predicated region
      $region41: #{stn_forward.5} parent=39 // pred_check
        %p323 = pneg %p48
      $region42: #{stn_forward.5} parent=39 // pred_check_branch
        %325 = sbr.rel (%p323) target = $region44
      $region43: #{stn_forward.5} parent=39 // pred_region
        %p326 = scmp.lt.s32.totalorder %s23, 1
        %s327 = scalar_select %p326, %s23, 1
        %s328 = smul.addr %s327, 11
        %s329 = smul.addr %s328, 8
        %s330 = scalar_lea.vmem %s0, %s329
      $region44: #{stn_forward.5} parent=39 // pred_fallthru
        _
      // Predicated region
      $region45: #{stn_forward.5} parent=39 // pred_check
        %p331 = pneg %p74
      $region46: #{stn_forward.5} parent=39 // pred_check_branch
        %333 = sbr.rel (%p331) target = $region48
      $region47: #{stn_forward.5} parent=39 // pred_region
        %p334 = scmp.lt.s32.totalorder %s23, 1
        %s335 = scalar_select %p334, %s23, 1
        %s336 = scalar_lea.vmem %s1, %s335
      $region48: #{stn_forward.5} parent=39 // pred_fallthru
        _
      // Predicated region
      $region49: #{stn_forward.5} parent=39 // pred_check
        %p337 = pneg %p184
      $region50: #{stn_forward.5} parent=39 // pred_check_branch
        %339 = sbr.rel (%p337) target = $region52
      $region51: #{stn_forward.5} parent=39 // pred_region
        %p340 = scmp.lt.s32.totalorder %s24, 6
        %s341 = scalar_select %p340, %s24, 6
        %s342 = scalar_lea.vmem %s6, %s341
      $region52: #{stn_forward.5} parent=39 // pred_fallthru
        _
      // Predicated region
      $region53: #{stn_forward.5} parent=39 // pred_check
        %p343 = pneg %p210
      $region54: #{stn_forward.5} parent=39 // pred_check_branch
        %345 = sbr.rel (%p343) target = $region56
      $region55: #{stn_forward.5} parent=39 // pred_region
        %p346 = scmp.lt.s32.totalorder %s24, 6
        %s347 = scalar_select %p346, %s24, 6
        %s348 = scalar_lea.vmem %s7, %s347
      $region56: #{stn_forward.5} parent=39 // pred_fallthru
        _
    $region40: #{stn_forward.5} parent=5 // pred_fallthru
      _
    %p349 = scmp.le.s32.totalorder 1, %s16
    %p350 = scmp.lt.s32.totalorder %s16, 15
    %p351 = pnand %p349, %p350
    %p352 = pneg %p351
    // Predicated region
    $region57: #{stn_forward.5} parent=5 // pred_check
      _
    $region58: #{stn_forward.5} parent=5 // pred_check_branch
      %354 = sbr.rel (%p351) target = $region60
    $region59: #{stn_forward.5} parent=5 // pred_region
      %s355 = ssub.s32 %s16, 1
      %p356 = scmp.lt.s32.totalorder %s25, 1
      %s357 = scalar_select %p356, %s25, 1
      %s358 = smul.addr %s357, 11
      %s359 = smul.addr %s358, 8
      %s360 = scalar_lea.vmem %s0, %s359
      %p361 = pneg %p54
      %p362 = pneg %p51
      %p363 = scmp.lt.s32.totalorder %s25, 1
      %s364 = scalar_select %p363, %s25, 1
      %s365 = scalar_lea.vmem %s1, %s364
      %p366 = pneg %p80
      %p367 = pneg %p77
      %p368 = pneg %p101
      %p369 = pneg %p98
      %p370 = pneg %p122
      %p371 = pneg %p119
      %p372 = pneg %p143
      %p373 = pneg %p140
      %p374 = pneg %p164
      %p375 = pneg %p161
      %p376 = scmp.lt.s32.totalorder %s26, 6
      %s377 = scalar_select %p376, %s26, 6
      %s378 = scalar_lea.vmem %s6, %s377
      %p379 = pneg %p190
      %p380 = pneg %p187
      %p381 = scmp.lt.s32.totalorder %s26, 6
      %s382 = scalar_select %p381, %s26, 6
      %s383 = scalar_lea.vmem %s7, %s382
      %p384 = pneg %p216
      %p385 = pneg %p213
      %p386 = pneg %p237
      %p387 = pneg %p234
      %p388 = pneg %p258
      %p389 = pneg %p255
      %p390 = pneg %p286
      %p391 = pneg %p283
      %p392 = scmp.lt.s32.totalorder %s25, 1
      %s393 = scalar_select %p392, %s25, 1
      %p394 = scmp.lt.s32.totalorder %s26, 6
      %s395 = scalar_select %p394, %s26, 6
      %s396 = smul.addr %s393, 7
      %s397 = sadd.s32 %s395, %s396
      %s398 = smul.addr %s397, 4
      %s399 = scalar_lea.vmem %s10, %s398
      %p400 = scmp.lt.s32.totalorder %s25, 1
      %s401 = scalar_select %p400, %s25, 1
      %s402 = smul.addr %s401, 11
      %s403 = smul.addr %s402, 8
      %s404 = scalar_lea.vmem %s0, %s403
      %p405 = scmp.lt.s32.totalorder %s25, 1
      %s406 = scalar_select %p405, %s25, 1
      %s407 = scalar_lea.vmem %s1, %s406
      %p408 = scmp.lt.s32.totalorder %s26, 6
      %s409 = scalar_select %p408, %s26, 6
      %s410 = scalar_lea.vmem %s6, %s409
      %p411 = scmp.lt.s32.totalorder %s26, 6
      %s412 = scalar_select %p411, %s26, 6
      %s413 = scalar_lea.vmem %s7, %s412
      %p414 = scmp.lt.s32.totalorder %s25, 1
      %s415 = scalar_select %p414, %s25, 1
      %p416 = scmp.lt.s32.totalorder %s26, 6
      %s417 = scalar_select %p416, %s26, 6
      %s418 = smul.addr %s415, 7
      %s419 = sadd.s32 %s417, %s418
      %s420 = smul.addr %s419, 4
      %s421 = scalar_lea.vmem %s10, %s420
      %p422 = scmp.eq.s32.totalorder %s26, 0
      // Predicated region
      $region61: #{stn_forward.5} parent=59 // pred_check
        %p423 = pneg %p422
      $region62: #{stn_forward.5} parent=59 // pred_check_branch
        %425 = sbr.rel (%p423) target = $region64
      $region63: #{stn_forward.5} parent=59 // pred_region
        %v426 = vld [vmem:[%s407] sm:$0x1]
        %v427 = vld [vmem:[%s2] sm:$0xff]
        %v428 = vld [vmem:[%s2 + $0x8] sm:$0xff]
        %v429 = vld [vmem:[%s2 + $0x10] sm:$0xff]
        %v430 = vld [vmem:[%s2 + $0x18] sm:$0xff]
        %v431 = vld [vmem:[%s2 + $0x20] sm:$0xff]
        %v432 = vld [vmem:[%s2 + $0x28] sm:$0xff]
        %v433 = vld [vmem:[%s2 + $0x30] sm:$0xff]
        %v434 = vld [vmem:[%s2 + $0x38] sm:$0xff]
        %v435 = vld [vmem:[%s2 + $0x40] sm:$0xff]
        %v436 = vld [vmem:[%s2 + $0x48] sm:$0xff]
        %v437 = vld [vmem:[%s2 + $0x50] sm:$0xff]
        %v438 = vld [vmem:[%s2 + $0x58] sm:$0x3]
        %v439 = vld [vmem:[%s3] sm:$0x1]
        %vm440 = vcmask 736256
        %v442 = vsel %vm440, %v426, 0
        %vm444 = vcmask 1041408
        %v446 = vsel %vm444, %v438, 0
        %448 = vmatprep.subr.mxu0 0.0
        %449 = vmatpush1.msra.mxu0 %v427
        %450 = vmatprep.subr.mxu0 0.0
        %451 = vmatpush1.msra.mxu0 %v428
        %452 = vmatprep.subr.mxu0 0.0
        %453 = vmatpush1.msra.mxu0 %v429
        %454 = vmatprep.subr.mxu0 0.0
        %455 = vmatpush1.msra.mxu0 %v430
        %456 = vmatprep.subr.mxu0 0.0
        %457 = vmatpush1.msra.mxu0 %v431
        %458 = vmatprep.subr.mxu0 0.0
        %459 = vmatpush1.msra.mxu0 %v432
        %460 = vmatprep.subr.mxu0 0.0
        %461 = vmatpush1.msra.mxu0 %v433
        %462 = vmatprep.subr.mxu0 0.0
        %463 = vmatpush1.msra.mxu0 %v434
        %464 = vmatprep.subr.mxu0 0.0
        %465 = vmatpush1.msra.mxu0 %v435
        %466 = vmatprep.subr.mxu0 0.0
        %467 = vmatpush1.msra.mxu0 %v436
        %468 = vmatprep.subr.mxu0 0.0
        %469 = vmatpush1.msra.mxu0 %v437
        %470 = vmatprep.subr.mxu0 0.0
        %471 = vmatpush1.msra.mxu0 %v446
        %472 = vmatprep.subr.mxu0 0.0
        %473 = vmatpush1.msra.mxu0 0.0
        %474 = vmatprep.subr.mxu0 0.0
        %475 = vmatpush1.msra.mxu0 0.0
        %476 = vmatprep.subr.mxu0 0.0
        %477 = vmatpush1.msra.mxu0 0.0
        %478 = vmatprep.subr.mxu0 0.0
        %479 = vmatpush1.msra.mxu0 0.0
        %480 = vmatprep.subr.mxu0 0.0
        %481 = vmatpush1.msra.mxu0 0.0
        %482 = vmatprep.subr.mxu0 0.0
        %483 = vmatpush1.msra.mxu0 0.0
        %484 = vmatprep.subr.mxu0 0.0
        %485 = vmatpush1.msra.mxu0 0.0
        %486 = vmatprep.subr.mxu0 0.0
        %487 = vmatpush1.msra.mxu0 0.0
        %488 = vmatprep.subr.mxu0 0.0
        %489 = vmatpush1.msra.mxu0 0.0
        %490 = vmatprep.subr.mxu0 0.0
        %491 = vmatpush1.msra.mxu0 0.0
        %492 = vmatprep.subr.mxu0 0.0
        %493 = vmatpush1.msra.mxu0 0.0
        %494 = vmatprep.subr.mxu0 0.0
        %495 = vmatpush1.msra.mxu0 0.0
        %496 = vmatprep.subr.mxu0 0.0
        %497 = vmatpush1.msra.mxu0 0.0
        %498 = vmatprep.subr.mxu0 0.0
        %499 = vmatpush1.msra.mxu0 0.0
        %500 = vmatprep.subr.mxu0 0.0
        %501 = vmatpush1.msra.mxu0 0.0
        %502 = vmatprep.subr.mxu0 0.0
        %503 = vmatpush1.msra.mxu0 0.0
        %504 = vmatprep.subr.mxu0 0.0
        %505 = vmatpush1.msra.mxu0 0.0
        %506 = vmatprep.subr.mxu0 0.0
        %507 = vmatpush1.msra.mxu0 0.0
        %508 = vmatprep.subr.mxu0 0.0
        %509 = vmatpush1.msra.mxu0 0.0
        %510 = vmatprep.subr.mxu0 0.0
        %511 = vmatpush1.msra.mxu0 0.0
        %512 = vmatprep.mubr.f32.mxu0 0.0
        %513 = vmatmul.mubr.f32.gmra.mrb[0].mxu0 %v442
        %v514 = vpop.f32.mrb[0].mxu0
        %v515 = vadd.f32 %v439, %v514
        %v516 = vpop.f32.mrb[0].mxu0
        %517 = vdwg.mxu0
        %v518 = vmax.f32 %v515, 0.0
        %v519 = vld [vmem:[%s4] sm:$0xff]
        %v520 = vld [vmem:[%s4 + $0x8] sm:$0xff]
        %v521 = vld [vmem:[%s4 + $0x10] sm:$0xff]
        %v522 = vld [vmem:[%s4 + $0x18] sm:$0xff]
        %v523 = vld [vmem:[%s5] sm:$0x1]
        %vm524 = vcmask 261120
        %v526 = vsel %vm524, %v518, 0
        %528 = vmatprep.subr.mxu0 0.0
        %529 = vmatpush1.msra.mxu0 %v519
        %530 = vmatprep.subr.mxu0 0.0
        %531 = vmatpush1.msra.mxu0 %v520
        %532 = vmatprep.subr.mxu0 0.0
        %533 = vmatpush1.msra.mxu0 %v521
        %534 = vmatprep.subr.mxu0 0.0
        %535 = vmatpush1.msra.mxu0 %v522
        %536 = vmatprep.subr.mxu0 0.0
        %537 = vmatpush1.msra.mxu0 0.0
        %538 = vmatprep.subr.mxu0 0.0
        %539 = vmatpush1.msra.mxu0 0.0
        %540 = vmatprep.subr.mxu0 0.0
        %541 = vmatpush1.msra.mxu0 0.0
        %542 = vmatprep.subr.mxu0 0.0
        %543 = vmatpush1.msra.mxu0 0.0
        %544 = vmatprep.subr.mxu0 0.0
        %545 = vmatpush1.msra.mxu0 0.0
        %546 = vmatprep.subr.mxu0 0.0
        %547 = vmatpush1.msra.mxu0 0.0
        %548 = vmatprep.subr.mxu0 0.0
        %549 = vmatpush1.msra.mxu0 0.0
        %550 = vmatprep.subr.mxu0 0.0
        %551 = vmatpush1.msra.mxu0 0.0
        %552 = vmatprep.subr.mxu0 0.0
        %553 = vmatpush1.msra.mxu0 0.0
        %554 = vmatprep.subr.mxu0 0.0
        %555 = vmatpush1.msra.mxu0 0.0
        %556 = vmatprep.subr.mxu0 0.0
        %557 = vmatpush1.msra.mxu0 0.0
        %558 = vmatprep.subr.mxu0 0.0
        %559 = vmatpush1.msra.mxu0 0.0
        %560 = vmatprep.subr.mxu0 0.0
        %561 = vmatpush1.msra.mxu0 0.0
        %562 = vmatprep.subr.mxu0 0.0
        %563 = vmatpush1.msra.mxu0 0.0
        %564 = vmatprep.subr.mxu0 0.0
        %565 = vmatpush1.msra.mxu0 0.0
        %566 = vmatprep.subr.mxu0 0.0
        %567 = vmatpush1.msra.mxu0 0.0
        %568 = vmatprep.subr.mxu0 0.0
        %569 = vmatpush1.msra.mxu0 0.0
        %570 = vmatprep.subr.mxu0 0.0
        %571 = vmatpush1.msra.mxu0 0.0
        %572 = vmatprep.subr.mxu0 0.0
        %573 = vmatpush1.msra.mxu0 0.0
        %574 = vmatprep.subr.mxu0 0.0
        %575 = vmatpush1.msra.mxu0 0.0
        %576 = vmatprep.subr.mxu0 0.0
        %577 = vmatpush1.msra.mxu0 0.0
        %578 = vmatprep.subr.mxu0 0.0
        %579 = vmatpush1.msra.mxu0 0.0
        %580 = vmatprep.subr.mxu0 0.0
        %581 = vmatpush1.msra.mxu0 0.0
        %582 = vmatprep.subr.mxu0 0.0
        %583 = vmatpush1.msra.mxu0 0.0
        %584 = vmatprep.subr.mxu0 0.0
        %585 = vmatpush1.msra.mxu0 0.0
        %586 = vmatprep.subr.mxu0 0.0
        %587 = vmatpush1.msra.mxu0 0.0
        %588 = vmatprep.subr.mxu0 0.0
        %589 = vmatpush1.msra.mxu0 0.0
        %590 = vmatprep.subr.mxu0 0.0
        %591 = vmatpush1.msra.mxu0 0.0
        %592 = vmatprep.mubr.f32.mxu0 0.0
        %593 = vmatmul.mubr.f32.gmra.mrb[0].mxu0 %v526
        %v594 = vpop.f32.mrb[0].mxu0
        %v595 = vadd.f32 %v523, %v594
        %v596 = vpop.f32.mrb[0].mxu0
        %597 = vdwg.mxu0
        %vm598 = vcmask 40960
        %599 = vst.msk [vmem:[#allocation2] sm:$0x1] %vm598, %v595
      $region64: #{stn_forward.5} parent=59 // pred_fallthru
        _
      %v600 = vld [vmem:[#allocation2] sm:$0x1]
      %v601 = vld [vmem:[%s410] sm:$0x1]
      %v602 = vld [vmem:[%s413] sm:$0x1]
      %604 = vset.pattern.permute.xlu0 0
      %605 = vperm.xlu0 %604, %v600
      %v606 = vpop.permute.xlu0 %605
      %v608 = vlaneseq
      %v609 = vshrl.u32 %v608, 7
      %v610 = vsub.s32 0, %v609
      %v611 = vrot.slane %v606, %v610
      %v612 = vmul.f32 %v611, %v601
      %613 = vset.pattern.permute.xlu0 1
      %614 = vperm.xlu0 %613, %v600
      %v615 = vpop.permute.xlu0 %614
      %v617 = vlaneseq
      %v618 = vshrl.u32 %v617, 7
      %v619 = vsub.s32 0, %v618
      %v620 = vrot.slane %v615, %v619
      %v621 = vmul.f32 %v620, %v602
      %v622 = vadd.f32 %v612, %v621
      %623 = vset.pattern.permute.xlu0 2
      %624 = vperm.xlu0 %623, %v600
      %v625 = vpop.permute.xlu0 %624
      %v627 = vlaneseq
      %v628 = vshrl.u32 %v627, 7
      %v629 = vsub.s32 0, %v628
      %v630 = vrot.slane %v625, %v629
      %v631 = vadd.f32 %v622, %v630
      %632 = vset.pattern.permute.xlu0 3
      %633 = vperm.xlu0 %632, %v600
      %v634 = vpop.permute.xlu0 %633
      %v636 = vlaneseq
      %v637 = vshrl.u32 %v636, 7
      %v638 = vsub.s32 0, %v637
      %v639 = vrot.slane %v634, %v638
      %v640 = vmul.f32 %v639, %v601
      %641 = vset.pattern.permute.xlu0 4
      %642 = vperm.xlu0 %641, %v600
      %v643 = vpop.permute.xlu0 %642
      %v645 = vlaneseq
      %v646 = vshrl.u32 %v645, 7
      %v647 = vsub.s32 0, %v646
      %v648 = vrot.slane %v643, %v647
      %v649 = vmul.f32 %v648, %v602
      %v650 = vadd.f32 %v640, %v649
      %651 = vset.pattern.permute.xlu0 5
      %652 = vperm.xlu0 %651, %v600
      %v653 = vpop.permute.xlu0 %652
      %v655 = vlaneseq
      %v656 = vshrl.u32 %v655, 7
      %v657 = vsub.s32 0, %v656
      %v658 = vrot.slane %v653, %v657
      %v659 = vadd.f32 %v650, %v658
      %v660 = vadd.f32 %v631, 1.0
      %v661 = vmul.f32 %v660, 28.0
      %v662 = vsub.f32 %v661, 1.0
      %v663 = vmul.f32 %v662, 0.5
      %v664 = vadd.f32 %v659, 1.0
      %v665 = vmul.f32 %v664, 28.0
      %v666 = vsub.f32 %v665, 1.0
      %v667 = vmul.f32 %v666, 0.5
      %v668 = vfloor.f32 %v663
      %v669 = vfloor.f32 %v667
      %v670 = vsub.f32 %v663, %v668
      %v671 = vsub.f32 1.0, %v670
      %v672 = vsub.f32 %v667, %v669
      %v673 = vsub.f32 1.0, %v672
      %v674 = vcvt.f32.s32.to.zero.pseudo %v668
      %v675 = vadd.s32 %v674, 1
      %v676 = vcvt.f32.s32.to.zero.pseudo %v669
      %v677 = vadd.s32 %v676, 1
      %vm678 = vcmp.ge.s32.totalorder %v674, 0
      %vm679 = vcmp.le.s32.totalorder %v674, 27
      %vm680 = vmand %vm678, %vm679
      %vm681 = vcmp.ge.s32.totalorder %v675, 0
      %vm682 = vcmp.le.s32.totalorder %v675, 27
      %vm683 = vmand %vm681, %vm682
      %vm684 = vcmp.ge.s32.totalorder %v676, 0
      %vm685 = vcmp.le.s32.totalorder %v676, 27
      %vm686 = vmand %vm684, %vm685
      %vm687 = vcmp.ge.s32.totalorder %v677, 0
      %vm688 = vcmp.le.s32.totalorder %v677, 27
      %vm689 = vmand %vm687, %vm688
      %v690 = vlaneseq
      %v691 = vshrl.u32 %v690, 7
      %v692 = vadd.s32 %v691, 8
      %v693 = vadd.s32 %v691, 16
      %v694 = vadd.s32 %v691, 24
      %v695 = vlaneseq
      %v696 = vshrl.u32 %v695, 7
      %v697 = vsub.s32 0, %v696
      %v698 = vrot.slane %v674, %v697
      %vm699 = vcmp.eq.s32.totalorder %v691, %v698
      %vm700 = vcmp.eq.s32.totalorder %v692, %v698
      %vm701 = vcmp.eq.s32.totalorder %v693, %v698
      %vm702 = vcmp.eq.s32.totalorder %v694, %v698
      %v703 = vsel %vm680, 1, 0
      %v704 = vlaneseq
      %v705 = vshrl.u32 %v704, 7
      %v706 = vsub.s32 0, %v705
      %v707 = vrot.slane %v703, %v706
      %vm708 = vcmp.eq.s32.totalorder %v707, 1
      %vm709 = vmand %vm699, %vm708
      %vm710 = vmand %vm700, %vm708
      %vm711 = vmand %vm701, %vm708
      %vm712 = vmand %vm702, %vm708
      %v714 = vlaneseq
      %v715 = vshrl.u32 %v714, 7
      %v716 = vsub.s32 0, %v715
      %v717 = vrot.slane %v671, %v716
      %v719 = vsel %vm709, %v717, 0.0
      %v720 = vsel %vm710, %v717, 0.0
      %v721 = vsel %vm711, %v717, 0.0
      %v722 = vsel %vm712, %v717, 0.0
      %v723 = vlaneseq
      %v724 = vshrl.u32 %v723, 7
      %v725 = vsub.s32 0, %v724
      %v726 = vrot.slane %v675, %v725
      %vm727 = vcmp.eq.s32.totalorder %v691, %v726
      %vm728 = vcmp.eq.s32.totalorder %v692, %v726
      %vm729 = vcmp.eq.s32.totalorder %v693, %v726
      %vm730 = vcmp.eq.s32.totalorder %v694, %v726
      %v731 = vsel %vm683, 1, 0
      %v732 = vlaneseq
      %v733 = vshrl.u32 %v732, 7
      %v734 = vsub.s32 0, %v733
      %v735 = vrot.slane %v731, %v734
      %vm736 = vcmp.eq.s32.totalorder %v735, 1
      %vm737 = vmand %vm727, %vm736
      %vm738 = vmand %vm728, %vm736
      %vm739 = vmand %vm729, %vm736
      %vm740 = vmand %vm730, %vm736
      %v742 = vlaneseq
      %v743 = vshrl.u32 %v742, 7
      %v744 = vsub.s32 0, %v743
      %v745 = vrot.slane %v670, %v744
      %v747 = vsel %vm737, %v745, 0.0
      %v748 = vsel %vm738, %v745, 0.0
      %v749 = vsel %vm739, %v745, 0.0
      %v750 = vsel %vm740, %v745, 0.0
      %v751 = vadd.f32 %v719, %v747
      %v752 = vadd.f32 %v720, %v748
      %v753 = vadd.f32 %v721, %v749
      %v754 = vadd.f32 %v722, %v750
      %v755 = vld [vmem:[%s8] sm:$0xff]
      %v756 = vld [vmem:[%s8 + $0x8] sm:$0xff]
      %v757 = vld [vmem:[%s8 + $0x10] sm:$0xff]
      %v758 = vld [vmem:[%s8 + $0x18] sm:$0xff]
      %v759 = vld [vmem:[%s8 + $0x20] sm:$0xff]
      %v760 = vld [vmem:[%s8 + $0x28] sm:$0xff]
      %v761 = vld [vmem:[%s8 + $0x30] sm:$0xff]
      %v762 = vld [vmem:[%s8 + $0x38] sm:$0xff]
      %v763 = vld [vmem:[%s8 + $0x40] sm:$0xff]
      %v764 = vld [vmem:[%s8 + $0x48] sm:$0xff]
      %v765 = vld [vmem:[%s8 + $0x50] sm:$0xf]
      %766 = vset.pattern.permute.xlu0 0
      %767 = vperm.xlu0 %766, %v755
      %v768 = vpop.permute.xlu0 %767
      %769 = vset.pattern.permute.xlu0 0
      %770 = vperm.xlu0 %769, %v756
      %v771 = vpop.permute.xlu0 %770
      %772 = vset.pattern.permute.xlu0 0
      %773 = vperm.xlu0 %772, %v757
      %v774 = vpop.permute.xlu0 %773
      %775 = vset.pattern.permute.xlu0 0
      %776 = vperm.xlu0 %775, %v758
      %v777 = vpop.permute.xlu0 %776
      %778 = vset.pattern.permute.xlu0 0
      %779 = vperm.xlu0 %778, %v759
      %v780 = vpop.permute.xlu0 %779
      %781 = vset.pattern.permute.xlu0 0
      %782 = vperm.xlu0 %781, %v760
      %v783 = vpop.permute.xlu0 %782
      %784 = vset.pattern.permute.xlu0 0
      %785 = vperm.xlu0 %784, %v761
      %v786 = vpop.permute.xlu0 %785
      %787 = vset.pattern.permute.xlu0 0
      %788 = vperm.xlu0 %787, %v762
      %v789 = vpop.permute.xlu0 %788
      %790 = vset.pattern.permute.xlu0 0
      %791 = vperm.xlu0 %790, %v763
      %v792 = vpop.permute.xlu0 %791
      %793 = vset.pattern.permute.xlu0 0
      %794 = vperm.xlu0 %793, %v764
      %v795 = vpop.permute.xlu0 %794
      %796 = vset.pattern.permute.xlu0 0
      %797 = vperm.xlu0 %796, %v765
      %v798 = vpop.permute.xlu0 %797
      %v799 = vlaneseq
      %v800 = vshrl.u32 %v799, 7
      %v801 = vsub.s32 0, %v800
      %v802 = vrot.slane %v676, %v801
      %vm803 = vcmp.eq.s32.totalorder %v768, %v802
      %vm804 = vcmp.eq.s32.totalorder %v771, %v802
      %vm805 = vcmp.eq.s32.totalorder %v774, %v802
      %vm806 = vcmp.eq.s32.totalorder %v777, %v802
      %vm807 = vcmp.eq.s32.totalorder %v780, %v802
      %vm808 = vcmp.eq.s32.totalorder %v783, %v802
      %vm809 = vcmp.eq.s32.totalorder %v786, %v802
      %vm810 = vcmp.eq.s32.totalorder %v789, %v802
      %vm811 = vcmp.eq.s32.totalorder %v792, %v802
      %vm812 = vcmp.eq.s32.totalorder %v795, %v802
      %vm813 = vcmp.eq.s32.totalorder %v798, %v802
      %v814 = vsel %vm686, 1, 0
      %v815 = vlaneseq
      %v816 = vshrl.u32 %v815, 7
      %v817 = vsub.s32 0, %v816
      %v818 = vrot.slane %v814, %v817
      %vm819 = vcmp.eq.s32.totalorder %v818, 1
      %vm820 = vmand %vm803, %vm819
      %vm821 = vmand %vm804, %vm819
      %vm822 = vmand %vm805, %vm819
      %vm823 = vmand %vm806, %vm819
      %vm824 = vmand %vm807, %vm819
      %vm825 = vmand %vm808, %vm819
      %vm826 = vmand %vm809, %vm819
      %vm827 = vmand %vm810, %vm819
      %vm828 = vmand %vm811, %vm819
      %vm829 = vmand %vm812, %vm819
      %vm830 = vmand %vm813, %vm819
      %v832 = vlaneseq
      %v833 = vshrl.u32 %v832, 7
      %v834 = vsub.s32 0, %v833
      %v835 = vrot.slane %v673, %v834
      %v837 = vsel %vm820, %v835, 0.0
      %v838 = vsel %vm821, %v835, 0.0
      %v839 = vsel %vm822, %v835, 0.0
      %v840 = vsel %vm823, %v835, 0.0
      %v841 = vsel %vm824, %v835, 0.0
      %v842 = vsel %vm825, %v835, 0.0
      %v843 = vsel %vm826, %v835, 0.0
      %v844 = vsel %vm827, %v835, 0.0
      %v845 = vsel %vm828, %v835, 0.0
      %v846 = vsel %vm829, %v835, 0.0
      %v847 = vsel %vm830, %v835, 0.0
      %v848 = vlaneseq
      %v849 = vshrl.u32 %v848, 7
      %v850 = vsub.s32 0, %v849
      %v851 = vrot.slane %v677, %v850
      %vm852 = vcmp.eq.s32.totalorder %v768, %v851
      %vm853 = vcmp.eq.s32.totalorder %v771, %v851
      %vm854 = vcmp.eq.s32.totalorder %v774, %v851
      %vm855 = vcmp.eq.s32.totalorder %v777, %v851
      %vm856 = vcmp.eq.s32.totalorder %v780, %v851
      %vm857 = vcmp.eq.s32.totalorder %v783, %v851
      %vm858 = vcmp.eq.s32.totalorder %v786, %v851
      %vm859 = vcmp.eq.s32.totalorder %v789, %v851
      %vm860 = vcmp.eq.s32.totalorder %v792, %v851
      %vm861 = vcmp.eq.s32.totalorder %v795, %v851
      %vm862 = vcmp.eq.s32.totalorder %v798, %v851
      %v863 = vsel %vm689, 1, 0
      %v864 = vlaneseq
      %v865 = vshrl.u32 %v864, 7
      %v866 = vsub.s32 0, %v865
      %v867 = vrot.slane %v863, %v866
      %vm868 = vcmp.eq.s32.totalorder %v867, 1
      %vm869 = vmand %vm852, %vm868
      %vm870 = vmand %vm853, %vm868
      %vm871 = vmand %vm854, %vm868
      %vm872 = vmand %vm855, %vm868
      %vm873 = vmand %vm856, %vm868
      %vm874 = vmand %vm857, %vm868
      %vm875 = vmand %vm858, %vm868
      %vm876 = vmand %vm859, %vm868
      %vm877 = vmand %vm860, %vm868
      %vm878 = vmand %vm861, %vm868
      %vm879 = vmand %vm862, %vm868
      %v881 = vlaneseq
      %v882 = vshrl.u32 %v881, 7
      %v883 = vsub.s32 0, %v882
      %v884 = vrot.slane %v672, %v883
      %v886 = vsel %vm869, %v884, 0.0
      %v887 = vsel %vm870, %v884, 0.0
      %v888 = vsel %vm871, %v884, 0.0
      %v889 = vsel %vm872, %v884, 0.0
      %v890 = vsel %vm873, %v884, 0.0
      %v891 = vsel %vm874, %v884, 0.0
      %v892 = vsel %vm875, %v884, 0.0
      %v893 = vsel %vm876, %v884, 0.0
      %v894 = vsel %vm877, %v884, 0.0
      %v895 = vsel %vm878, %v884, 0.0
      %v896 = vsel %vm879, %v884, 0.0
      %v897 = vadd.f32 %v837, %v886
      %v898 = vadd.f32 %v838, %v887
      %v899 = vadd.f32 %v839, %v888
      %v900 = vadd.f32 %v840, %v889
      %v901 = vadd.f32 %v841, %v890
      %v902 = vadd.f32 %v842, %v891
      %v903 = vadd.f32 %v843, %v892
      %v904 = vadd.f32 %v844, %v893
      %v905 = vadd.f32 %v845, %v894
      %v906 = vadd.f32 %v846, %v895
      %v907 = vadd.f32 %v847, %v896
      %v908 = vld [vmem:[%s404] sm:$0xff]
      %v909 = vld [vmem:[%s404 + $0x8] sm:$0xff]
      %v910 = vld [vmem:[%s404 + $0x10] sm:$0xff]
      %v911 = vld [vmem:[%s404 + $0x18] sm:$0xff]
      %v912 = vld [vmem:[%s404 + $0x20] sm:$0xff]
      %v913 = vld [vmem:[%s404 + $0x28] sm:$0xff]
      %v914 = vld [vmem:[%s404 + $0x30] sm:$0xff]
      %v915 = vld [vmem:[%s404 + $0x38] sm:$0xff]
      %v916 = vld [vmem:[%s404 + $0x40] sm:$0xff]
      %v917 = vld [vmem:[%s404 + $0x48] sm:$0xff]
      %v918 = vld [vmem:[%s404 + $0x50] sm:$0xf]
      %vm919 = vcmask 228352
      %v921 = vsel %vm919, %v908, 0
      %v924 = vsel %vm919, %v909, 0
      %v927 = vsel %vm919, %v910, 0
      %v930 = vsel %vm919, %v911, 0
      %v933 = vsel %vm919, %v912, 0
      %v936 = vsel %vm919, %v913, 0
      %v939 = vsel %vm919, %v914, 0
      %v942 = vsel %vm919, %v915, 0
      %v945 = vsel %vm919, %v916, 0
      %v948 = vsel %vm919, %v917, 0
      %v951 = vsel %vm919, %v918, 0
      %vm953 = vcmask 1043456
      %v955 = vsel %vm953, %v754, 0
      %957 = vmatprep.subr.mxu0 0.0
      %958 = vmatpush1.msra.mxu0 %v751
      %959 = vmatprep.subr.mxu0 0.0
      %960 = vmatpush1.msra.mxu0 %v752
      %961 = vmatprep.subr.mxu0 0.0
      %962 = vmatpush1.msra.mxu0 %v753
      %963 = vmatprep.subr.mxu0 0.0
      %964 = vmatpush1.msra.mxu0 %v955
      %965 = vmatprep.subr.mxu0 0.0
      %966 = vmatpush1.msra.mxu0 0.0
      %967 = vmatprep.subr.mxu0 0.0
      %968 = vmatpush1.msra.mxu0 0.0
      %969 = vmatprep.subr.mxu0 0.0
      %970 = vmatpush1.msra.mxu0 0.0
      %971 = vmatprep.subr.mxu0 0.0
      %972 = vmatpush1.msra.mxu0 0.0
      %973 = vmatprep.subr.mxu0 0.0
      %974 = vmatpush1.msra.mxu0 0.0
      %975 = vmatprep.subr.mxu0 0.0
      %976 = vmatpush1.msra.mxu0 0.0
      %977 = vmatprep.subr.mxu0 0.0
      %978 = vmatpush1.msra.mxu0 0.0
      %979 = vmatprep.subr.mxu0 0.0
      %980 = vmatpush1.msra.mxu0 0.0
      %981 = vmatprep.subr.mxu0 0.0
      %982 = vmatpush1.msra.mxu0 0.0
      %983 = vmatprep.subr.mxu0 0.0
      %984 = vmatpush1.msra.mxu0 0.0
      %985 = vmatprep.subr.mxu0 0.0
      %986 = vmatpush1.msra.mxu0 0.0
      %987 = vmatprep.subr.mxu0 0.0
      %988 = vmatpush1.msra.mxu0 0.0
      %989 = vmatprep.subr.mxu0 0.0
      %990 = vmatpush1.msra.mxu0 0.0
      %991 = vmatprep.subr.mxu0 0.0
      %992 = vmatpush1.msra.mxu0 0.0
      %993 = vmatprep.subr.mxu0 0.0
      %994 = vmatpush1.msra.mxu0 0.0
      %995 = vmatprep.subr.mxu0 0.0
      %996 = vmatpush1.msra.mxu0 0.0
      %997 = vmatprep.subr.mxu0 0.0
      %998 = vmatpush1.msra.mxu0 0.0
      %999 = vmatprep.subr.mxu0 0.0
      %1000 = vmatpush1.msra.mxu0 0.0
      %1001 = vmatprep.subr.mxu0 0.0
      %1002 = vmatpush1.msra.mxu0 0.0
      %1003 = vmatprep.subr.mxu0 0.0
      %1004 = vmatpush1.msra.mxu0 0.0
      %1005 = vmatprep.subr.mxu0 0.0
      %1006 = vmatpush1.msra.mxu0 0.0
      %1007 = vmatprep.subr.mxu0 0.0
      %1008 = vmatpush1.msra.mxu0 0.0
      %1009 = vmatprep.subr.mxu0 0.0
      %1010 = vmatpush1.msra.mxu0 0.0
      %1011 = vmatprep.subr.mxu0 0.0
      %1012 = vmatpush1.msra.mxu0 0.0
      %1013 = vmatprep.subr.mxu0 0.0
      %1014 = vmatpush1.msra.mxu0 0.0
      %1015 = vmatprep.subr.mxu0 0.0
      %1016 = vmatpush1.msra.mxu0 0.0
      %1017 = vmatprep.subr.mxu0 0.0
      %1018 = vmatpush1.msra.mxu0 0.0
      %1019 = vmatprep.subr.mxu0 0.0
      %1020 = vmatpush1.msra.mxu0 0.0
      %1021 = vmatprep.mubr.f32.mxu0 0.0
      %1022 = vmatmul.mubr.f32.gmra.mrb[0].mxu0 %v921
      %v1023 = vpop.f32.mrb[0].mxu0
      %v1024 = vadd.f32 0.0, %v1023
      %v1025 = vpop.f32.mrb[0].mxu0
      %1026 = vmatprep.mubr.f32.mxu0 0.0
      %1027 = vmatmul.mubr.f32.gmra.mrb[0].mxu0 %v924
      %v1028 = vpop.f32.mrb[0].mxu0
      %v1029 = vadd.f32 0.0, %v1028
      %v1030 = vpop.f32.mrb[0].mxu0
      %1031 = vmatprep.mubr.f32.mxu0 0.0
      %1032 = vmatmul.mubr.f32.gmra.mrb[0].mxu0 %v927
      %v1033 = vpop.f32.mrb[0].mxu0
      %v1034 = vadd.f32 0.0, %v1033
      %v1035 = vpop.f32.mrb[0].mxu0
      %1036 = vmatprep.mubr.f32.mxu0 0.0
      %1037 = vmatmul.mubr.f32.gmra.mrb[0].mxu0 %v930
      %v1038 = vpop.f32.mrb[0].mxu0
      %v1039 = vadd.f32 0.0, %v1038
      %v1040 = vpop.f32.mrb[0].mxu0
      %1041 = vmatprep.mubr.f32.mxu0 0.0
      %1042 = vmatmul.mubr.f32.gmra.mrb[0].mxu0 %v933
      %v1043 = vpop.f32.mrb[0].mxu0
      %v1044 = vadd.f32 0.0, %v1043
      %v1045 = vpop.f32.mrb[0].mxu0
      %1046 = vmatprep.mubr.f32.mxu0 0.0
      %1047 = vmatmul.mubr.f32.gmra.mrb[0].mxu0 %v936
      %v1048 = vpop.f32.mrb[0].mxu0
      %v1049 = vadd.f32 0.0, %v1048
      %v1050 = vpop.f32.mrb[0].mxu0
      %1051 = vmatprep.mubr.f32.mxu0 0.0
      %1052 = vmatmul.mubr.f32.gmra.mrb[0].mxu0 %v939
      %v1053 = vpop.f32.mrb[0].mxu0
      %v1054 = vadd.f32 0.0, %v1053
      %v1055 = vpop.f32.mrb[0].mxu0
      %1056 = vmatprep.mubr.f32.mxu0 0.0
      %1057 = vmatmul.mubr.f32.gmra.mrb[0].mxu0 %v942
      %v1058 = vpop.f32.mrb[0].mxu0
      %v1059 = vadd.f32 0.0, %v1058
      %v1060 = vpop.f32.mrb[0].mxu0
      %1061 = vmatprep.mubr.f32.mxu0 0.0
      %1062 = vmatmul.mubr.f32.gmra.mrb[0].mxu0 %v945
      %v1063 = vpop.f32.mrb[0].mxu0
      %v1064 = vadd.f32 0.0, %v1063
      %v1065 = vpop.f32.mrb[0].mxu0
      %1066 = vmatprep.mubr.f32.mxu0 0.0
      %1067 = vmatmul.mubr.f32.gmra.mrb[0].mxu0 %v948
      %v1068 = vpop.f32.mrb[0].mxu0
      %v1069 = vadd.f32 0.0, %v1068
      %v1070 = vpop.f32.mrb[0].mxu0
      %1071 = vmatprep.mubr.f32.mxu0 0.0
      %1072 = vmatmul.mubr.f32.gmra.mrb[0].mxu0 %v951
      %v1073 = vpop.f32.mrb[0].mxu0
      %v1074 = vadd.f32 0.0, %v1073
      %v1075 = vpop.f32.mrb[0].mxu0
      %1076 = vdwg.mxu0
      %v1077 = vld [vmem:[%s9] sm:$0x7]
      %v1078 = vmul.f32 %v1024, %v897
      %v1079 = vmul.f32 %v1029, %v898
      %v1080 = vmul.f32 %v1034, %v899
      %v1081 = vmul.f32 %v1039, %v900
      %v1082 = vmul.f32 %v1044, %v901
      %v1083 = vmul.f32 %v1049, %v902
      %v1084 = vmul.f32 %v1054, %v903
      %v1085 = vmul.f32 %v1059, %v904
      %v1086 = vmul.f32 %v1064, %v905
      %v1087 = vmul.f32 %v1069, %v906
      %v1088 = vmul.f32 %v1074, %v907
      %vm1089 = vcmask 687104
      %v1091 = vsel %vm1089, %v1077, 0
      %v1094 = vsel %vm953, %v1088, 0
      %1096 = vmatprep.subr.mxu0 0.0
      %1097 = vmatpush1.msra.mxu0 %v1078
      %1098 = vmatprep.subr.mxu0 0.0
      %1099 = vmatpush1.msra.mxu0 %v1079
      %1100 = vmatprep.subr.mxu0 0.0
      %1101 = vmatpush1.msra.mxu0 %v1080
      %1102 = vmatprep.subr.mxu0 0.0
      %1103 = vmatpush1.msra.mxu0 %v1081
      %1104 = vmatprep.subr.mxu0 0.0
      %1105 = vmatpush1.msra.mxu0 %v1082
      %1106 = vmatprep.subr.mxu0 0.0
      %1107 = vmatpush1.msra.mxu0 %v1083
      %1108 = vmatprep.subr.mxu0 0.0
      %1109 = vmatpush1.msra.mxu0 %v1084
      %1110 = vmatprep.subr.mxu0 0.0
      %1111 = vmatpush1.msra.mxu0 %v1085
      %1112 = vmatprep.subr.mxu0 0.0
      %1113 = vmatpush1.msra.mxu0 %v1086
      %1114 = vmatprep.subr.mxu0 0.0
      %1115 = vmatpush1.msra.mxu0 %v1087
      %1116 = vmatprep.subr.mxu0 0.0
      %1117 = vmatpush1.msra.mxu0 %v1094
      %1118 = vmatprep.subr.mxu0 0.0
      %1119 = vmatpush1.msra.mxu0 0.0
      %1120 = vmatprep.subr.mxu0 0.0
      %1121 = vmatpush1.msra.mxu0 0.0
      %1122 = vmatprep.subr.mxu0 0.0
      %1123 = vmatpush1.msra.mxu0 0.0
      %1124 = vmatprep.subr.mxu0 0.0
      %1125 = vmatpush1.msra.mxu0 0.0
      %1126 = vmatprep.subr.mxu0 0.0
      %1127 = vmatpush1.msra.mxu0 0.0
      %1128 = vmatprep.subr.mxu0 0.0
      %1129 = vmatpush1.msra.mxu0 0.0
      %1130 = vmatprep.subr.mxu0 0.0
      %1131 = vmatpush1.msra.mxu0 0.0
      %1132 = vmatprep.subr.mxu0 0.0
      %1133 = vmatpush1.msra.mxu0 0.0
      %1134 = vmatprep.subr.mxu0 0.0
      %1135 = vmatpush1.msra.mxu0 0.0
      %1136 = vmatprep.subr.mxu0 0.0
      %1137 = vmatpush1.msra.mxu0 0.0
      %1138 = vmatprep.subr.mxu0 0.0
      %1139 = vmatpush1.msra.mxu0 0.0
      %1140 = vmatprep.subr.mxu0 0.0
      %1141 = vmatpush1.msra.mxu0 0.0
      %1142 = vmatprep.subr.mxu0 0.0
      %1143 = vmatpush1.msra.mxu0 0.0
      %1144 = vmatprep.subr.mxu0 0.0
      %1145 = vmatpush1.msra.mxu0 0.0
      %1146 = vmatprep.subr.mxu0 0.0
      %1147 = vmatpush1.msra.mxu0 0.0
      %1148 = vmatprep.subr.mxu0 0.0
      %1149 = vmatpush1.msra.mxu0 0.0
      %1150 = vmatprep.subr.mxu0 0.0
      %1151 = vmatpush1.msra.mxu0 0.0
      %1152 = vmatprep.subr.mxu0 0.0
      %1153 = vmatpush1.msra.mxu0 0.0
      %1154 = vmatprep.subr.mxu0 0.0
      %1155 = vmatpush1.msra.mxu0 0.0
      %1156 = vmatprep.subr.mxu0 0.0
      %1157 = vmatpush1.msra.mxu0 0.0
      %1158 = vmatprep.subr.mxu0 0.0
      %1159 = vmatpush1.msra.mxu0 0.0
      %1160 = vmatprep.mubr.f32.mxu0 0.0
      %1161 = vmatmul.mubr.f32.gmra.mrb[0].mxu0 %v1091
      %v1162 = vpop.f32.mrb[0].mxu0
      %v1163 = vadd.f32 0.0, %v1162
      %v1164 = vpop.f32.mrb[0].mxu0
      %1165 = vdwg.mxu0
      %1166 = vst [vmem:[%s421] sm:$0x7] %v1163
      %p1167 = scmp.lt.s32.totalorder %s25, 1
      %s1168 = scalar_select %p1167, %s25, 1
      %p1169 = scmp.lt.s32.totalorder %s26, 6
      %s1170 = scalar_select %p1169, %s26, 6
      %s1171 = smul.addr %s1168, 7
      %s1172 = sadd.s32 %s1170, %s1171
      %s1173 = smul.addr %s1172, 4
      %s1174 = scalar_lea.vmem %s10, %s1173
      // Predicated region
      $region65: #{stn_forward.5} parent=59 // pred_check
        %p1175 = pneg %p283
      $region66: #{stn_forward.5} parent=59 // pred_check_branch
        %1177 = sbr.rel (%p1175) target = $region68
      $region67: #{stn_forward.5} parent=59 // pred_region
        _
      $region68: #{stn_forward.5} parent=59 // pred_fallthru
        _
    $region60: #{stn_forward.5} parent=5 // pred_fallthru
      _
    %p1178 = scmp.le.s32.totalorder 2, %s16
    // Predicated region
    $region69: #{stn_forward.5} parent=5 // pred_check
      %p1179 = pneg %p1178
    $region70: #{stn_forward.5} parent=5 // pred_check_branch
      %1181 = sbr.rel (%p1179) target = $region72
    $region71: #{stn_forward.5} parent=5 // pred_region
      %s1182 = ssub.s32 %s16, 2
      // Predicated region
      $region73: #{stn_forward.5} parent=71 // pred_check
        %p1183 = pneg %p289
      $region74: #{stn_forward.5} parent=71 // pred_check_branch
        %1185 = sbr.rel (%p1183) target = $region76
      $region75: #{stn_forward.5} parent=71 // pred_region
        %p1186 = scmp.lt.s32.totalorder %s27, 1
        %s1187 = scalar_select %p1186, %s27, 1
        %p1188 = scmp.lt.s32.totalorder %s28, 6
        %s1189 = scalar_select %p1188, %s28, 6
        %s1190 = smul.addr %s1187, 7
        %s1191 = sadd.s32 %s1189, %s1190
        %s1192 = smul.addr %s1191, 4
        %s1193 = scalar_lea.vmem %s10, %s1192
      $region76: #{stn_forward.5} parent=71 // pred_fallthru
        _
    $region72: #{stn_forward.5} parent=5 // pred_fallthru
      _
  $region6: #{stn_forward.5} parent=0 // loop_footer
    %s20 = sadd.s32 1, %s16
  $region7: #{stn_forward.5} parent=0 // loop_footer_branch
    %15 = sbr.rel target = $region3
  $region8: #{stn_forward.5} parent=0 // loop_exit
    _

</llo_original>
